<compile_context>
chip_gen: v7x
topology: tpu7x:2x2x1
jax: 0.10.0
libtpu: 0.0.40
codegen_flags: <defaults>
</compile_context>

<pallas_src>
import functools
import math

import jax
import jax.numpy as jnp
import numpy as np
from jax.experimental import pallas as pl
from jax.experimental.pallas import tpu as pltpu


def _round_up(x, m):
    return ((x + m - 1) // m) * m


def _pick_batch_block(B, Lq, Lk):
    """Largest batch block with ~256 projection rows per grid step whose row
    blocks remain (8,128)-tileable (or cover the whole array)."""
    target = max(1, 256 // max(Lq, 1))
    for cand in range(min(B, target), 0, -1):
        if B % cand:
            continue
        if cand == B or ((cand * Lq) % 8 == 0 and (cand * Lk) % 8 == 0):
            return cand
    return B


def rotary_attention_kernel(q_ref, k_ref, v_ref,
                            ccq_ref, ssq_ref, cck_ref, ssk_ref,
                            wq_ref, wk_ref, wv_ref, wo_ref,
                            bq_ref, bk_ref, bv_ref, bo_ref,
                            out_ref, attn_ref,
                            qswap_ref, kswap_ref, obuf_ref,
                            *, nhead, bt):
    f32 = jnp.float32
    bf16 = jnp.bfloat16

    rows_q, E = q_ref.shape
    rows_k = k_ref.shape[0]
    lq = rows_q // bt
    lk = rows_k // bt
    hd = E // nhead
    half = E // 2
    e_pad = out_ref.shape[-1]
    lk_pad = attn_ref.shape[-1]

    # ---- rotary on the *raw* q/k (element-wise math in f32) --------------------
    # rotate_half(x) = [x2, x1] is materialised once per tensor (VMEM scratch), so
    # the in-projection below is a single full-K (K=E) MXU matmul.
    q = q_ref[...]
    k = k_ref[...]
    qswap_ref[:, :half] = q[:, half:]
    qswap_ref[:, half:] = q[:, :half]
    kswap_ref[:, :half] = k[:, half:]
    kswap_ref[:, half:] = k[:, :half]
    # full-width tables: cc = [cos, cos], ss = [sin, -sin]
    q_rot = q * ccq_ref[...] + qswap_ref[...] * ssq_ref[...]
    k_rot = k * cck_ref[...] + kswap_ref[...] * ssk_ref[...]

    # ---- fused in-projection: bf16 MXU operands, f32 accumulation --------------
    # (the 1/sqrt(head_dim) attention scale is folded into wq/bq by the wrapper)
    qp = jnp.dot(q_rot.astype(bf16), wq_ref[...],
                 preferred_element_type=f32) + bq_ref[...]
    kp = jnp.dot(k_rot.astype(bf16), wk_ref[...],
                 preferred_element_type=f32) + bk_ref[...]
    vp = jnp.dot(v_ref[...], wv_ref[...],
                 preferred_element_type=f32) + bv_ref[...]

    # ---- per-head attention, batched over the batch block (dot_general batch dim)
    attn_acc = jnp.zeros((bt, lq, lk), f32)
    for h in range(nhead):                       # static unroll; nhead is small
        s = h * hd
        qh = qp[:, s:s + hd].reshape(bt, lq, hd).astype(bf16)
        kh = kp[:, s:s + hd].reshape(bt, lk, hd).astype(bf16)
        vh = vp[:, s:s + hd].reshape(bt, lk, hd).astype(bf16)

        logits = jnp.einsum('bqd,bkd->bqk', qh, kh,
                            preferred_element_type=f32)          # (bt, lq, lk)
        logits = logits - jnp.max(logits, axis=-1, keepdims=True)
        p = jnp.exp(logits)
        p = p * pl.reciprocal(jnp.sum(p, axis=-1, keepdims=True), approx=True)
        attn_acc = attn_acc + p

        o_h = jnp.einsum('bqk,bkd->bqd', p.astype(bf16), vh,
                         preferred_element_type=f32)             # (bt, lq, hd)
        obuf_ref[:, s:s + hd] = o_h.reshape(rows_q, hd)

    # ---- single K=E output projection after the head loop ----------------------
    out = jnp.dot(obuf_ref[...].astype(bf16), wo_ref[...],
                  preferred_element_type=f32) + bo_ref[...]      # (rows_q, E) f32

    # ---- lane-dense (128-padded) output blocks; wrapper slices the pad off -----
    out_ref[:, :E] = out
    if e_pad > E:
        out_ref[:, E:] = jnp.zeros((rows_q, e_pad - E), f32)
    attn_ref[:, :lk] = (attn_acc * (1.0 / nhead)).reshape(rows_q, lk)
    if lk_pad > lk:
        attn_ref[:, lk:] = jnp.zeros((rows_q, lk_pad - lk), f32)


def rotary_attention(query, key, value, params, nhead):
    """query/key/value: (L, B, E) float32, PyTorch seq-first layout.
    Returns (attn_output (Lq, B, E), avg_attn_weights (B, Lq, Lk)),
    matching nn.MultiheadAttention's default return."""
    Lq, B, E = query.shape
    Lk = key.shape[0]
    assert E % 2 == 0 and E % nhead == 0
    half = E // 2
    hd = E // nhead
    scale = 1.0 / math.sqrt(hd)

    bt = _pick_batch_block(B, Lq, Lk)
    grid = (B // bt,)
    rows_q = bt * Lq
    rows_k = bt * Lk
    e_pad = _round_up(E, 128)
    lk_pad = _round_up(Lk, 128)

    # (L, B, E) -> (B*L, E), batch-major rows.  v only feeds a matmul -> bf16.
    q2 = jnp.transpose(query, (1, 0, 2)).reshape(B * Lq, E).astype(jnp.float32)
    k2 = jnp.transpose(key, (1, 0, 2)).reshape(B * Lk, E).astype(jnp.float32)
    v2 = jnp.transpose(value, (1, 0, 2)).reshape(B * Lk, E).astype(jnp.bfloat16)

    # Rotary tables, full width [cos, cos] and [sin, -sin], tiled per batch block.
    inv_freq = 1.0 / (10000.0 ** (jnp.arange(0, E, 2, dtype=jnp.float32) / E))

    def tables(L):
        ang = jnp.outer(jnp.arange(L, dtype=jnp.float32), inv_freq)   # (L, E/2)
        sin, cos = jnp.sin(ang), jnp.cos(ang)
        cc = jnp.concatenate([cos, cos], axis=-1)                     # (L, E)
        ss = jnp.concatenate([sin, -sin], axis=-1)                    # (L, E)
        return jnp.tile(cc, (bt, 1)), jnp.tile(ss, (bt, 1))           # (bt*L, E)

    ccq, ssq = tables(Lq)
    cck, ssk = tables(Lk)

    # Parameters: fold the 1/sqrt(hd) scale into the q projection; bf16 weights.
    w_in = params["in_proj_weight"].astype(jnp.float32)   # (3E, E)
    b_in = params["in_proj_bias"].astype(jnp.float32)     # (3E,)
    wq = (w_in[:E].T * scale).astype(jnp.bfloat16)
    wk = w_in[E:2 * E].T.astype(jnp.bfloat16)
    wv = w_in[2 * E:].T.astype(jnp.bfloat16)
    wo = params["out_proj_weight"].astype(jnp.float32).T.astype(jnp.bfloat16)
    bq = (b_in[:E] * scale).reshape(1, E)
    bk = b_in[E:2 * E].reshape(1, E)
    bv = b_in[2 * E:].reshape(1, E)
    bo = params["out_proj_bias"].astype(jnp.float32).reshape(1, E)

    kernel = functools.partial(rotary_attention_kernel, nhead=nhead, bt=bt)
    shared = lambda b: (0, 0)

    out2, attn2 = pl.pallas_call(
        kernel,
        out_shape=(jax.ShapeDtypeStruct((B * Lq, e_pad), jnp.float32),
                   jax.ShapeDtypeStruct((B * Lq, lk_pad), jnp.float32)),
        grid=grid,
        in_specs=[
            pl.BlockSpec((rows_q, E), lambda b: (b, 0)),   # q
            pl.BlockSpec((rows_k, E), lambda b: (b, 0)),   # k
            pl.BlockSpec((rows_k, E), lambda b: (b, 0)),   # v
            pl.BlockSpec((rows_q, E), shared),             # [cos,cos] for q
            pl.BlockSpec((rows_q, E), shared),             # [sin,-sin] for q
            pl.BlockSpec((rows_k, E), shared),             # [cos,cos] for k
            pl.BlockSpec((rows_k, E), shared),             # [sin,-sin] for k
            pl.BlockSpec((E, E), shared),                  # wq (scaled, bf16)
            pl.BlockSpec((E, E), shared),                  # wk
            pl.BlockSpec((E, E), shared),                  # wv
            pl.BlockSpec((E, E), shared),                  # wo
            pl.BlockSpec((1, E), shared),                  # bq (scaled)
            pl.BlockSpec((1, E), shared),                  # bk
            pl.BlockSpec((1, E), shared),                  # bv
            pl.BlockSpec((1, E), shared),                  # bo
        ],
        out_specs=(pl.BlockSpec((rows_q, e_pad), lambda b: (b, 0)),
                   pl.BlockSpec((rows_q, lk_pad), lambda b: (b, 0))),
        scratch_shapes=[
            pltpu.VMEM((rows_q, E), jnp.float32),   # rotate-half(q)
            pltpu.VMEM((rows_k, E), jnp.float32),   # rotate-half(k)
            pltpu.VMEM((rows_q, E), jnp.float32),   # concatenated head outputs
        ],
        compiler_params=pltpu.CompilerParams(
            dimension_semantics=("parallel",),
            vmem_limit_bytes=32 * 1024 * 1024),
    )(q2, k2, v2, ccq, ssq, cck, ssk, wq, wk, wv, wo, bq, bk, bv, bo)

    out = jnp.transpose(out2[:, :E].reshape(B, Lq, E), (1, 0, 2))   # (Lq, B, E)
    attn = attn2[:, :Lk].reshape(B, Lq, Lk)                         # (B, Lq, Lk)
    return out, attn


def reference(query, key, value, params, nhead):
    """Pure-JAX (f32) replica of the PyTorch forward, for verification."""
    Lq, B, E = query.shape
    Lk = key.shape[0]
    hd = E // nhead
    inv_freq = 1.0 / (10000.0 ** (jnp.arange(0, E, 2, dtype=jnp.float32) / E))

    def rot(x, L):
        ang = jnp.outer(jnp.arange(L, dtype=jnp.float32), inv_freq)
        sin = jnp.sin(ang)[:, None, :]
        cos = jnp.cos(ang)[:, None, :]
        x1, x2 = x[..., :E // 2], x[..., E // 2:]
        return jnp.concatenate([x1 * cos + x2 * sin, x2 * cos - x1 * sin], -1)

    q = rot(query, Lq)
    k = rot(key, Lk)
    w_in = params["in_proj_weight"]
    b_in = params["in_proj_bias"]
    qp = q @ w_in[:E].T + b_in[:E]
    kp = k @ w_in[E:2 * E].T + b_in[E:2 * E]
    vp = value @ w_in[2 * E:].T + b_in[2 * E:]

    def heads(x, L):
        return x.reshape(L, B, nhead, hd).transpose(1, 2, 0, 3)  # (B, H, L, hd)

    qh = heads(qp, Lq) / math.sqrt(hd)
    kh = heads(kp, Lk)
    vh = heads(vp, Lk)
    logits = jnp.einsum('bhqd,bhkd->bhqk', qh, kh)
    p = jax.nn.softmax(logits, axis=-1)
    o = jnp.einsum('bhqk,bhkd->bhqd', p, vh)
    o = o.transpose(2, 0, 1, 3).reshape(Lq, B, E)
    out = o @ params["out_proj_weight"].T + params["out_proj_bias"]
    return out, p.mean(axis=1)


if __name__ == "__main__":
    emb_size, nhead = 32, 4
    Lq, Lk, B = 8, 8, 2

    key0 = jax.random.PRNGKey(0)
    ks = jax.random.split(key0, 8)

    # Deterministic synthetic parameters (shapes from nn.MultiheadAttention(emb_size, nhead)).
    params = {
        "in_proj_weight": 0.05 * jax.random.normal(ks[0], (3 * emb_size, emb_size), jnp.float32),
        "in_proj_bias":   0.05 * jax.random.normal(ks[1], (3 * emb_size,), jnp.float32),
        "out_proj_weight": 0.05 * jax.random.normal(ks[2], (emb_size, emb_size), jnp.float32),
        "out_proj_bias":   0.05 * jax.random.normal(ks[3], (emb_size,), jnp.float32),
    }

    query = jax.random.normal(ks[4], (Lq, B, emb_size), jnp.float32)
    key_t = jax.random.normal(ks[5], (Lk, B, emb_size), jnp.float32)
    value = jax.random.normal(ks[6], (Lk, B, emb_size), jnp.float32)

    out, attn = rotary_attention(query, key_t, value, params, nhead)
    out = jax.block_until_ready(out)
    attn = jax.block_until_ready(attn)

    ref_out, ref_attn = reference(query, key_t, value, params, nhead)
    # Tolerances loosened vs the f32 version: kernel matmuls use bf16 operands
    # (f32 accumulation) and an approximate softmax reciprocal.
    np.testing.assert_allclose(np.asarray(out), np.asarray(ref_out), rtol=2e-2, atol=2e-2)
    np.testing.assert_allclose(np.asarray(attn), np.asarray(ref_attn), rtol=2e-2, atol=2e-2)

    print("KERNEL_OK")
</pallas_src>

<mosaic_0001>
module attributes {stable_mosaic.version = 11 : i64} {
  func.func @rotary_attention_kernel(%arg0: i32, %arg1: memref<16x32xf32, #tpu.memory_space<vmem>>, %arg2: memref<16x32xf32, #tpu.memory_space<vmem>>, %arg3: memref<16x32xbf16, #tpu.memory_space<vmem>>, %arg4: memref<16x32xf32, #tpu.memory_space<vmem>>, %arg5: memref<16x32xf32, #tpu.memory_space<vmem>>, %arg6: memref<16x32xf32, #tpu.memory_space<vmem>>, %arg7: memref<16x32xf32, #tpu.memory_space<vmem>>, %arg8: memref<32x32xbf16, #tpu.memory_space<vmem>>, %arg9: memref<32x32xbf16, #tpu.memory_space<vmem>>, %arg10: memref<32x32xbf16, #tpu.memory_space<vmem>>, %arg11: memref<32x32xbf16, #tpu.memory_space<vmem>>, %arg12: memref<1x32xf32, #tpu.memory_space<vmem>>, %arg13: memref<1x32xf32, #tpu.memory_space<vmem>>, %arg14: memref<1x32xf32, #tpu.memory_space<vmem>>, %arg15: memref<1x32xf32, #tpu.memory_space<vmem>>, %arg16: memref<16x128xf32, #tpu.memory_space<vmem>>, %arg17: memref<16x128xf32, #tpu.memory_space<vmem>>, %arg18: memref<16x32xf32, #tpu.memory_space<vmem>>, %arg19: memref<16x32xf32, #tpu.memory_space<vmem>>, %arg20: memref<16x32xf32, #tpu.memory_space<vmem>>) attributes {dimension_semantics = [#tpu.dimension_semantics<parallel>], iteration_bounds = array<i64: 1>, scalar_prefetch = 0 : i64, scratch_operands = 3 : i64, tpu.core_type = #tpu.core_type<tc>, window_params = [{transform_indices = @transform_0, window_bounds = array<i64: 16, 32>}, {transform_indices = @transform_1, window_bounds = array<i64: 16, 32>}, {transform_indices = @transform_2, window_bounds = array<i64: 16, 32>}, {pipeline_mode = #tpu.pipeline_mode<synchronous>, transform_indices = @transform_3, window_bounds = array<i64: 16, 32>}, {pipeline_mode = #tpu.pipeline_mode<synchronous>, transform_indices = @transform_4, window_bounds = array<i64: 16, 32>}, {pipeline_mode = #tpu.pipeline_mode<synchronous>, transform_indices = @transform_5, window_bounds = array<i64: 16, 32>}, {pipeline_mode = #tpu.pipeline_mode<synchronous>, transform_indices = @transform_6, window_bounds = array<i64: 16, 32>}, {pipeline_mode = #tpu.pipeline_mode<synchronous>, transform_indices = @transform_7, window_bounds = array<i64: 32, 32>}, {pipeline_mode = #tpu.pipeline_mode<synchronous>, transform_indices = @transform_8, window_bounds = array<i64: 32, 32>}, {pipeline_mode = #tpu.pipeline_mode<synchronous>, transform_indices = @transform_9, window_bounds = array<i64: 32, 32>}, {pipeline_mode = #tpu.pipeline_mode<synchronous>, transform_indices = @transform_10, window_bounds = array<i64: 32, 32>}, {pipeline_mode = #tpu.pipeline_mode<synchronous>, transform_indices = @transform_11, window_bounds = array<i64: 1, 32>}, {pipeline_mode = #tpu.pipeline_mode<synchronous>, transform_indices = @transform_12, window_bounds = array<i64: 1, 32>}, {pipeline_mode = #tpu.pipeline_mode<synchronous>, transform_indices = @transform_13, window_bounds = array<i64: 1, 32>}, {pipeline_mode = #tpu.pipeline_mode<synchronous>, transform_indices = @transform_14, window_bounds = array<i64: 1, 32>}, {transform_indices = @transform_15, window_bounds = array<i64: 16, 128>}, {transform_indices = @transform_16, window_bounds = array<i64: 16, 128>}]} {
    %c0 = arith.constant 0 : index
    %c0_0 = arith.constant 0 : index
    %0 = vector.load %arg1[%c0, %c0_0] : memref<16x32xf32, #tpu.memory_space<vmem>>, vector<16x32xf32>
    %c0_1 = arith.constant 0 : index
    %c0_2 = arith.constant 0 : index
    %1 = vector.load %arg2[%c0_1, %c0_2] : memref<16x32xf32, #tpu.memory_space<vmem>>, vector<16x32xf32>
    %2 = vector.extract_strided_slice %0 {offsets = [0, 16], sizes = [16, 16], strides = [1, 1]} : vector<16x32xf32> to vector<16x16xf32>
    %c0_3 = arith.constant 0 : index
    %c0_4 = arith.constant 0 : index
    %3 = vector.load %arg18[%c0_3, %c0_4] : memref<16x32xf32, #tpu.memory_space<vmem>>, vector<16x16xf32>
    tpu.vector_store %arg18[%c0_3, %c0_4], %2 {strides = array<i32>} : memref<16x32xf32, #tpu.memory_space<vmem>>, vector<16x16xf32>,
    %4 = vector.extract_strided_slice %0 {offsets = [0, 0], sizes = [16, 16], strides = [1, 1]} : vector<16x32xf32> to vector<16x16xf32>
    %c0_5 = arith.constant 0 : index
    %c16 = arith.constant 16 : index
    %5 = vector.load %arg18[%c0_5, %c16] : memref<16x32xf32, #tpu.memory_space<vmem>>, vector<16x16xf32>
    tpu.vector_store %arg18[%c0_5, %c16], %4 {strides = array<i32>} : memref<16x32xf32, #tpu.memory_space<vmem>>, vector<16x16xf32>,
    %6 = vector.extract_strided_slice %1 {offsets = [0, 16], sizes = [16, 16], strides = [1, 1]} : vector<16x32xf32> to vector<16x16xf32>
    %c0_6 = arith.constant 0 : index
    %c0_7 = arith.constant 0 : index
    %7 = vector.load %arg19[%c0_6, %c0_7] : memref<16x32xf32, #tpu.memory_space<vmem>>, vector<16x16xf32>
    tpu.vector_store %arg19[%c0_6, %c0_7], %6 {strides = array<i32>} : memref<16x32xf32, #tpu.memory_space<vmem>>, vector<16x16xf32>,
    %8 = vector.extract_strided_slice %1 {offsets = [0, 0], sizes = [16, 16], strides = [1, 1]} : vector<16x32xf32> to vector<16x16xf32>
    %c0_8 = arith.constant 0 : index
    %c16_9 = arith.constant 16 : index
    %9 = vector.load %arg19[%c0_8, %c16_9] : memref<16x32xf32, #tpu.memory_space<vmem>>, vector<16x16xf32>
    tpu.vector_store %arg19[%c0_8, %c16_9], %8 {strides = array<i32>} : memref<16x32xf32, #tpu.memory_space<vmem>>, vector<16x16xf32>,
    %c0_10 = arith.constant 0 : index
    %c0_11 = arith.constant 0 : index
    %10 = vector.load %arg4[%c0_10, %c0_11] : memref<16x32xf32, #tpu.memory_space<vmem>>, vector<16x32xf32>
    %11 = arith.mulf %0, %10 : vector<16x32xf32>
    %c0_12 = arith.constant 0 : index
    %c0_13 = arith.constant 0 : index
    %12 = vector.load %arg18[%c0_12, %c0_13] : memref<16x32xf32, #tpu.memory_space<vmem>>, vector<16x32xf32>
    %c0_14 = arith.constant 0 : index
    %c0_15 = arith.constant 0 : index
    %13 = vector.load %arg5[%c0_14, %c0_15] : memref<16x32xf32, #tpu.memory_space<vmem>>, vector<16x32xf32>
    %14 = arith.mulf %12, %13 : vector<16x32xf32>
    %15 = arith.addf %11, %14 : vector<16x32xf32>
    %c0_16 = arith.constant 0 : index
    %c0_17 = arith.constant 0 : index
    %16 = vector.load %arg6[%c0_16, %c0_17] : memref<16x32xf32, #tpu.memory_space<vmem>>, vector<16x32xf32>
    %17 = arith.mulf %1, %16 : vector<16x32xf32>
    %c0_18 = arith.constant 0 : index
    %c0_19 = arith.constant 0 : index
    %18 = vector.load %arg19[%c0_18, %c0_19] : memref<16x32xf32, #tpu.memory_space<vmem>>, vector<16x32xf32>
    %c0_20 = arith.constant 0 : index
    %c0_21 = arith.constant 0 : index
    %19 = vector.load %arg7[%c0_20, %c0_21] : memref<16x32xf32, #tpu.memory_space<vmem>>, vector<16x32xf32>
    %20 = arith.mulf %18, %19 : vector<16x32xf32>
    %21 = arith.addf %17, %20 : vector<16x32xf32>
    %22 = arith.truncf %15 : vector<16x32xf32> to vector<16x32xbf16>
    %c0_22 = arith.constant 0 : index
    %c0_23 = arith.constant 0 : index
    %23 = vector.load %arg8[%c0_22, %c0_23] : memref<32x32xbf16, #tpu.memory_space<vmem>>, vector<32x32xbf16>
    %cst = arith.constant dense<0.000000e+00> : vector<16x32xf32>
    %24 = tpu.matmul %22, %23, %cst {dimension_numbers = #tpu.dot_dimension_numbers<[1], [0], [0], [1], [0, 0, 1, 1], [], []>} : vector<16x32xbf16>, vector<32x32xbf16>, vector<16x32xf32> -> vector<16x32xf32>
    %c0_24 = arith.constant 0 : index
    %c0_25 = arith.constant 0 : index
    %25 = vector.load %arg12[%c0_24, %c0_25] : memref<1x32xf32, #tpu.memory_space<vmem>>, vector<1x32xf32>
    %26 = vector.broadcast %25 : vector<1x32xf32> to vector<16x32xf32>
    %27 = arith.addf %24, %26 : vector<16x32xf32>
    %28 = arith.truncf %21 : vector<16x32xf32> to vector<16x32xbf16>
    %c0_26 = arith.constant 0 : index
    %c0_27 = arith.constant 0 : index
    %29 = vector.load %arg9[%c0_26, %c0_27] : memref<32x32xbf16, #tpu.memory_space<vmem>>, vector<32x32xbf16>
    %cst_28 = arith.constant dense<0.000000e+00> : vector<16x32xf32>
    %30 = tpu.matmul %28, %29, %cst_28 {dimension_numbers = #tpu.dot_dimension_numbers<[1], [0], [0], [1], [0, 0, 1, 1], [], []>} : vector<16x32xbf16>, vector<32x32xbf16>, vector<16x32xf32> -> vector<16x32xf32>
    %c0_29 = arith.constant 0 : index
    %c0_30 = arith.constant 0 : index
    %31 = vector.load %arg13[%c0_29, %c0_30] : memref<1x32xf32, #tpu.memory_space<vmem>>, vector<1x32xf32>
    %32 = vector.broadcast %31 : vector<1x32xf32> to vector<16x32xf32>
    %33 = arith.addf %30, %32 : vector<16x32xf32>
    %c0_31 = arith.constant 0 : index
    %c0_32 = arith.constant 0 : index
    %34 = vector.load %arg3[%c0_31, %c0_32] : memref<16x32xbf16, #tpu.memory_space<vmem>>, vector<16x32xbf16>
    %c0_33 = arith.constant 0 : index
    %c0_34 = arith.constant 0 : index
    %35 = vector.load %arg10[%c0_33, %c0_34] : memref<32x32xbf16, #tpu.memory_space<vmem>>, vector<32x32xbf16>
    %cst_35 = arith.constant dense<0.000000e+00> : vector<16x32xf32>
    %36 = tpu.matmul %34, %35, %cst_35 {dimension_numbers = #tpu.dot_dimension_numbers<[1], [0], [0], [1], [0, 0, 1, 1], [], []>} : vector<16x32xbf16>, vector<32x32xbf16>, vector<16x32xf32> -> vector<16x32xf32>
    %c0_36 = arith.constant 0 : index
    %c0_37 = arith.constant 0 : index
    %37 = vector.load %arg14[%c0_36, %c0_37] : memref<1x32xf32, #tpu.memory_space<vmem>>, vector<1x32xf32>
    %38 = vector.broadcast %37 : vector<1x32xf32> to vector<16x32xf32>
    %39 = arith.addf %36, %38 : vector<16x32xf32>
    %cst_38 = arith.constant 0.000000e+00 : f32
    %40 = vector.broadcast %cst_38 : f32 to vector<2x8x8xf32>
    %41 = vector.extract_strided_slice %27 {offsets = [0, 0], sizes = [16, 8], strides = [1, 1]} : vector<16x32xf32> to vector<16x8xf32>
    %42 = vector.shape_cast %41 : vector<16x8xf32> to vector<2x8x8xf32>
    %43 = arith.truncf %42 : vector<2x8x8xf32> to vector<2x8x8xbf16>
    %44 = vector.extract_strided_slice %33 {offsets = [0, 0], sizes = [16, 8], strides = [1, 1]} : vector<16x32xf32> to vector<16x8xf32>
    %45 = vector.shape_cast %44 : vector<16x8xf32> to vector<2x8x8xf32>
    %46 = arith.truncf %45 : vector<2x8x8xf32> to vector<2x8x8xbf16>
    %47 = vector.extract_strided_slice %39 {offsets = [0, 0], sizes = [16, 8], strides = [1, 1]} : vector<16x32xf32> to vector<16x8xf32>
    %48 = vector.shape_cast %47 : vector<16x8xf32> to vector<2x8x8xf32>
    %49 = arith.truncf %48 : vector<2x8x8xf32> to vector<2x8x8xbf16>
    "tpu.trace_start"() <{level = 10 : i32, message = "bqd,bkd->bqk"}> : () -> ()
    %cst_39 = arith.constant dense<0.000000e+00> : vector<2x8x8xf32>
    %50 = tpu.matmul %43, %46, %cst_39 {dimension_numbers = #tpu.dot_dimension_numbers<[2], [2], [1], [1], [0, 0, 0, 1, 1, 1], [0], [0]>} : vector<2x8x8xbf16>, vector<2x8x8xbf16>, vector<2x8x8xf32> -> vector<2x8x8xf32>
    "tpu.trace_stop"() : () -> ()
    %cst_40 = arith.constant dense<0xFF800000> : vector<2x8xf32>
    %51 = vector.multi_reduction <maximumf>, %50, %cst_40 [2] : vector<2x8x8xf32> to vector<2x8xf32>
    %52 = vector.shape_cast %51 : vector<2x8xf32> to vector<2x8x1xf32>
    %53 = vector.broadcast %52 : vector<2x8x1xf32> to vector<2x8x8xf32>
    %54 = arith.subf %50, %53 : vector<2x8x8xf32>
    %55 = math.exp %54 : vector<2x8x8xf32>
    %cst_41 = arith.constant dense<0.000000e+00> : vector<2x8xf32>
    %56 = vector.multi_reduction <add>, %55, %cst_41 [2] : vector<2x8x8xf32> to vector<2x8xf32>
    %57 = vector.shape_cast %56 : vector<2x8xf32> to vector<2x8x1xf32>
    %58 = tpu.reciprocal %57 {approx = true} : vector<2x8x1xf32> -> vector<2x8x1xf32>
    %59 = vector.broadcast %58 : vector<2x8x1xf32> to vector<2x8x8xf32>
    %60 = arith.mulf %55, %59 : vector<2x8x8xf32>
    %61 = arith.addf %40, %60 : vector<2x8x8xf32>
    %62 = arith.truncf %60 : vector<2x8x8xf32> to vector<2x8x8xbf16>
    "tpu.trace_start"() <{level = 10 : i32, message = "bqk,bkd->bqd"}> : () -> ()
    %cst_42 = arith.constant dense<0.000000e+00> : vector<2x8x8xf32>
    %63 = tpu.matmul %62, %49, %cst_42 {dimension_numbers = #tpu.dot_dimension_numbers<[2], [1], [1], [2], [0, 0, 0, 1, 1, 2], [0], [0]>} : vector<2x8x8xbf16>, vector<2x8x8xbf16>, vector<2x8x8xf32> -> vector<2x8x8xf32>
    "tpu.trace_stop"() : () -> ()
    %64 = vector.shape_cast %63 : vector<2x8x8xf32> to vector<16x8xf32>
    %c0_43 = arith.constant 0 : index
    %c0_44 = arith.constant 0 : index
    %65 = vector.load %arg20[%c0_43, %c0_44] : memref<16x32xf32, #tpu.memory_space<vmem>>, vector<16x8xf32>
    tpu.vector_store %arg20[%c0_43, %c0_44], %64 {strides = array<i32>} : memref<16x32xf32, #tpu.memory_space<vmem>>, vector<16x8xf32>,
    %66 = vector.extract_strided_slice %27 {offsets = [0, 8], sizes = [16, 8], strides = [1, 1]} : vector<16x32xf32> to vector<16x8xf32>
    %67 = vector.shape_cast %66 : vector<16x8xf32> to vector<2x8x8xf32>
    %68 = arith.truncf %67 : vector<2x8x8xf32> to vector<2x8x8xbf16>
    %69 = vector.extract_strided_slice %33 {offsets = [0, 8], sizes = [16, 8], strides = [1, 1]} : vector<16x32xf32> to vector<16x8xf32>
    %70 = vector.shape_cast %69 : vector<16x8xf32> to vector<2x8x8xf32>
    %71 = arith.truncf %70 : vector<2x8x8xf32> to vector<2x8x8xbf16>
    %72 = vector.extract_strided_slice %39 {offsets = [0, 8], sizes = [16, 8], strides = [1, 1]} : vector<16x32xf32> to vector<16x8xf32>
    %73 = vector.shape_cast %72 : vector<16x8xf32> to vector<2x8x8xf32>
    %74 = arith.truncf %73 : vector<2x8x8xf32> to vector<2x8x8xbf16>
    "tpu.trace_start"() <{level = 10 : i32, message = "bqd,bkd->bqk"}> : () -> ()
    %cst_45 = arith.constant dense<0.000000e+00> : vector<2x8x8xf32>
    %75 = tpu.matmul %68, %71, %cst_45 {dimension_numbers = #tpu.dot_dimension_numbers<[2], [2], [1], [1], [0, 0, 0, 1, 1, 1], [0], [0]>} : vector<2x8x8xbf16>, vector<2x8x8xbf16>, vector<2x8x8xf32> -> vector<2x8x8xf32>
    "tpu.trace_stop"() : () -> ()
    %cst_46 = arith.constant dense<0xFF800000> : vector<2x8xf32>
    %76 = vector.multi_reduction <maximumf>, %75, %cst_46 [2] : vector<2x8x8xf32> to vector<2x8xf32>
    %77 = vector.shape_cast %76 : vector<2x8xf32> to vector<2x8x1xf32>
    %78 = vector.broadcast %77 : vector<2x8x1xf32> to vector<2x8x8xf32>
    %79 = arith.subf %75, %78 : vector<2x8x8xf32>
    %80 = math.exp %79 : vector<2x8x8xf32>
    %cst_47 = arith.constant dense<0.000000e+00> : vector<2x8xf32>
    %81 = vector.multi_reduction <add>, %80, %cst_47 [2] : vector<2x8x8xf32> to vector<2x8xf32>
    %82 = vector.shape_cast %81 : vector<2x8xf32> to vector<2x8x1xf32>
    %83 = tpu.reciprocal %82 {approx = true} : vector<2x8x1xf32> -> vector<2x8x1xf32>
    %84 = vector.broadcast %83 : vector<2x8x1xf32> to vector<2x8x8xf32>
    %85 = arith.mulf %80, %84 : vector<2x8x8xf32>
    %86 = arith.addf %61, %85 : vector<2x8x8xf32>
    %87 = arith.truncf %85 : vector<2x8x8xf32> to vector<2x8x8xbf16>
    "tpu.trace_start"() <{level = 10 : i32, message = "bqk,bkd->bqd"}> : () -> ()
    %cst_48 = arith.constant dense<0.000000e+00> : vector<2x8x8xf32>
    %88 = tpu.matmul %87, %74, %cst_48 {dimension_numbers = #tpu.dot_dimension_numbers<[2], [1], [1], [2], [0, 0, 0, 1, 1, 2], [0], [0]>} : vector<2x8x8xbf16>, vector<2x8x8xbf16>, vector<2x8x8xf32> -> vector<2x8x8xf32>
    "tpu.trace_stop"() : () -> ()
    %89 = vector.shape_cast %88 : vector<2x8x8xf32> to vector<16x8xf32>
    %c0_49 = arith.constant 0 : index
    %c8 = arith.constant 8 : index
    %90 = vector.load %arg20[%c0_49, %c8] : memref<16x32xf32, #tpu.memory_space<vmem>>, vector<16x8xf32>
    tpu.vector_store %arg20[%c0_49, %c8], %89 {strides = array<i32>} : memref<16x32xf32, #tpu.memory_space<vmem>>, vector<16x8xf32>,
    %91 = vector.extract_strided_slice %27 {offsets = [0, 16], sizes = [16, 8], strides = [1, 1]} : vector<16x32xf32> to vector<16x8xf32>
    %92 = vector.shape_cast %91 : vector<16x8xf32> to vector<2x8x8xf32>
    %93 = arith.truncf %92 : vector<2x8x8xf32> to vector<2x8x8xbf16>
    %94 = vector.extract_strided_slice %33 {offsets = [0, 16], sizes = [16, 8], strides = [1, 1]} : vector<16x32xf32> to vector<16x8xf32>
    %95 = vector.shape_cast %94 : vector<16x8xf32> to vector<2x8x8xf32>
    %96 = arith.truncf %95 : vector<2x8x8xf32> to vector<2x8x8xbf16>
    %97 = vector.extract_strided_slice %39 {offsets = [0, 16], sizes = [16, 8], strides = [1, 1]} : vector<16x32xf32> to vector<16x8xf32>
    %98 = vector.shape_cast %97 : vector<16x8xf32> to vector<2x8x8xf32>
    %99 = arith.truncf %98 : vector<2x8x8xf32> to vector<2x8x8xbf16>
    "tpu.trace_start"() <{level = 10 : i32, message = "bqd,bkd->bqk"}> : () -> ()
    %cst_50 = arith.constant dense<0.000000e+00> : vector<2x8x8xf32>
    %100 = tpu.matmul %93, %96, %cst_50 {dimension_numbers = #tpu.dot_dimension_numbers<[2], [2], [1], [1], [0, 0, 0, 1, 1, 1], [0], [0]>} : vector<2x8x8xbf16>, vector<2x8x8xbf16>, vector<2x8x8xf32> -> vector<2x8x8xf32>
    "tpu.trace_stop"() : () -> ()
    %cst_51 = arith.constant dense<0xFF800000> : vector<2x8xf32>
    %101 = vector.multi_reduction <maximumf>, %100, %cst_51 [2] : vector<2x8x8xf32> to vector<2x8xf32>
    %102 = vector.shape_cast %101 : vector<2x8xf32> to vector<2x8x1xf32>
    %103 = vector.broadcast %102 : vector<2x8x1xf32> to vector<2x8x8xf32>
    %104 = arith.subf %100, %103 : vector<2x8x8xf32>
    %105 = math.exp %104 : vector<2x8x8xf32>
    %cst_52 = arith.constant dense<0.000000e+00> : vector<2x8xf32>
    %106 = vector.multi_reduction <add>, %105, %cst_52 [2] : vector<2x8x8xf32> to vector<2x8xf32>
    %107 = vector.shape_cast %106 : vector<2x8xf32> to vector<2x8x1xf32>
    %108 = tpu.reciprocal %107 {approx = true} : vector<2x8x1xf32> -> vector<2x8x1xf32>
    %109 = vector.broadcast %108 : vector<2x8x1xf32> to vector<2x8x8xf32>
    %110 = arith.mulf %105, %109 : vector<2x8x8xf32>
    %111 = arith.addf %86, %110 : vector<2x8x8xf32>
    %112 = arith.truncf %110 : vector<2x8x8xf32> to vector<2x8x8xbf16>
    "tpu.trace_start"() <{level = 10 : i32, message = "bqk,bkd->bqd"}> : () -> ()
    %cst_53 = arith.constant dense<0.000000e+00> : vector<2x8x8xf32>
    %113 = tpu.matmul %112, %99, %cst_53 {dimension_numbers = #tpu.dot_dimension_numbers<[2], [1], [1], [2], [0, 0, 0, 1, 1, 2], [0], [0]>} : vector<2x8x8xbf16>, vector<2x8x8xbf16>, vector<2x8x8xf32> -> vector<2x8x8xf32>
    "tpu.trace_stop"() : () -> ()
    %114 = vector.shape_cast %113 : vector<2x8x8xf32> to vector<16x8xf32>
    %c0_54 = arith.constant 0 : index
    %c16_55 = arith.constant 16 : index
    %115 = vector.load %arg20[%c0_54, %c16_55] : memref<16x32xf32, #tpu.memory_space<vmem>>, vector<16x8xf32>
    tpu.vector_store %arg20[%c0_54, %c16_55], %114 {strides = array<i32>} : memref<16x32xf32, #tpu.memory_space<vmem>>, vector<16x8xf32>,
    %116 = vector.extract_strided_slice %27 {offsets = [0, 24], sizes = [16, 8], strides = [1, 1]} : vector<16x32xf32> to vector<16x8xf32>
    %117 = vector.shape_cast %116 : vector<16x8xf32> to vector<2x8x8xf32>
    %118 = arith.truncf %117 : vector<2x8x8xf32> to vector<2x8x8xbf16>
    %119 = vector.extract_strided_slice %33 {offsets = [0, 24], sizes = [16, 8], strides = [1, 1]} : vector<16x32xf32> to vector<16x8xf32>
    %120 = vector.shape_cast %119 : vector<16x8xf32> to vector<2x8x8xf32>
    %121 = arith.truncf %120 : vector<2x8x8xf32> to vector<2x8x8xbf16>
    %122 = vector.extract_strided_slice %39 {offsets = [0, 24], sizes = [16, 8], strides = [1, 1]} : vector<16x32xf32> to vector<16x8xf32>
    %123 = vector.shape_cast %122 : vector<16x8xf32> to vector<2x8x8xf32>
    %124 = arith.truncf %123 : vector<2x8x8xf32> to vector<2x8x8xbf16>
    "tpu.trace_start"() <{level = 10 : i32, message = "bqd,bkd->bqk"}> : () -> ()
    %cst_56 = arith.constant dense<0.000000e+00> : vector<2x8x8xf32>
    %125 = tpu.matmul %118, %121, %cst_56 {dimension_numbers = #tpu.dot_dimension_numbers<[2], [2], [1], [1], [0, 0, 0, 1, 1, 1], [0], [0]>} : vector<2x8x8xbf16>, vector<2x8x8xbf16>, vector<2x8x8xf32> -> vector<2x8x8xf32>
    "tpu.trace_stop"() : () -> ()
    %cst_57 = arith.constant dense<0xFF800000> : vector<2x8xf32>
    %126 = vector.multi_reduction <maximumf>, %125, %cst_57 [2] : vector<2x8x8xf32> to vector<2x8xf32>
    %127 = vector.shape_cast %126 : vector<2x8xf32> to vector<2x8x1xf32>
    %128 = vector.broadcast %127 : vector<2x8x1xf32> to vector<2x8x8xf32>
    %129 = arith.subf %125, %128 : vector<2x8x8xf32>
    %130 = math.exp %129 : vector<2x8x8xf32>
    %cst_58 = arith.constant dense<0.000000e+00> : vector<2x8xf32>
    %131 = vector.multi_reduction <add>, %130, %cst_58 [2] : vector<2x8x8xf32> to vector<2x8xf32>
    %132 = vector.shape_cast %131 : vector<2x8xf32> to vector<2x8x1xf32>
    %133 = tpu.reciprocal %132 {approx = true} : vector<2x8x1xf32> -> vector<2x8x1xf32>
    %134 = vector.broadcast %133 : vector<2x8x1xf32> to vector<2x8x8xf32>
    %135 = arith.mulf %130, %134 : vector<2x8x8xf32>
    %136 = arith.addf %111, %135 : vector<2x8x8xf32>
    %137 = arith.truncf %135 : vector<2x8x8xf32> to vector<2x8x8xbf16>
    "tpu.trace_start"() <{level = 10 : i32, message = "bqk,bkd->bqd"}> : () -> ()
    %cst_59 = arith.constant dense<0.000000e+00> : vector<2x8x8xf32>
    %138 = tpu.matmul %137, %124, %cst_59 {dimension_numbers = #tpu.dot_dimension_numbers<[2], [1], [1], [2], [0, 0, 0, 1, 1, 2], [0], [0]>} : vector<2x8x8xbf16>, vector<2x8x8xbf16>, vector<2x8x8xf32> -> vector<2x8x8xf32>
    "tpu.trace_stop"() : () -> ()
    %139 = vector.shape_cast %138 : vector<2x8x8xf32> to vector<16x8xf32>
    %c0_60 = arith.constant 0 : index
    %c24 = arith.constant 24 : index
    %140 = vector.load %arg20[%c0_60, %c24] : memref<16x32xf32, #tpu.memory_space<vmem>>, vector<16x8xf32>
    tpu.vector_store %arg20[%c0_60, %c24], %139 {strides = array<i32>} : memref<16x32xf32, #tpu.memory_space<vmem>>, vector<16x8xf32>,
    %c0_61 = arith.constant 0 : index
    %c0_62 = arith.constant 0 : index
    %141 = vector.load %arg20[%c0_61, %c0_62] : memref<16x32xf32, #tpu.memory_space<vmem>>, vector<16x32xf32>
    %142 = arith.truncf %141 : vector<16x32xf32> to vector<16x32xbf16>
    %c0_63 = arith.constant 0 : index
    %c0_64 = arith.constant 0 : index
    %143 = vector.load %arg11[%c0_63, %c0_64] : memref<32x32xbf16, #tpu.memory_space<vmem>>, vector<32x32xbf16>
    %cst_65 = arith.constant dense<0.000000e+00> : vector<16x32xf32>
    %144 = tpu.matmul %142, %143, %cst_65 {dimension_numbers = #tpu.dot_dimension_numbers<[1], [0], [0], [1], [0, 0, 1, 1], [], []>} : vector<16x32xbf16>, vector<32x32xbf16>, vector<16x32xf32> -> vector<16x32xf32>
    %c0_66 = arith.constant 0 : index
    %c0_67 = arith.constant 0 : index
    %145 = vector.load %arg15[%c0_66, %c0_67] : memref<1x32xf32, #tpu.memory_space<vmem>>, vector<1x32xf32>
    %146 = vector.broadcast %145 : vector<1x32xf32> to vector<16x32xf32>
    %147 = arith.addf %144, %146 : vector<16x32xf32>
    %c0_68 = arith.constant 0 : index
    %c0_69 = arith.constant 0 : index
    %148 = vector.load %arg16[%c0_68, %c0_69] : memref<16x128xf32, #tpu.memory_space<vmem>>, vector<16x32xf32>
    tpu.vector_store %arg16[%c0_68, %c0_69], %147 {strides = array<i32>} : memref<16x128xf32, #tpu.memory_space<vmem>>, vector<16x32xf32>,
    %cst_70 = arith.constant 0.000000e+00 : f32
    %149 = vector.broadcast %cst_70 : f32 to vector<16x96xf32>
    %c0_71 = arith.constant 0 : index
    %c32 = arith.constant 32 : index
    %150 = vector.load %arg16[%c0_71, %c32] : memref<16x128xf32, #tpu.memory_space<vmem>>, vector<16x96xf32>
    tpu.vector_store %arg16[%c0_71, %c32], %149 {strides = array<i32>} : memref<16x128xf32, #tpu.memory_space<vmem>>, vector<16x96xf32>,
    %cst_72 = arith.constant 2.500000e-01 : f32
    %151 = vector.broadcast %cst_72 : f32 to vector<2x8x8xf32>
    %152 = arith.mulf %136, %151 : vector<2x8x8xf32>
    %153 = vector.shape_cast %152 : vector<2x8x8xf32> to vector<16x8xf32>
    %c0_73 = arith.constant 0 : index
    %c0_74 = arith.constant 0 : index
    %154 = vector.load %arg17[%c0_73, %c0_74] : memref<16x128xf32, #tpu.memory_space<vmem>>, vector<16x8xf32>
    tpu.vector_store %arg17[%c0_73, %c0_74], %153 {strides = array<i32>} : memref<16x128xf32, #tpu.memory_space<vmem>>, vector<16x8xf32>,
    %cst_75 = arith.constant 0.000000e+00 : f32
    %155 = vector.broadcast %cst_75 : f32 to vector<16x120xf32>
    %c0_76 = arith.constant 0 : index
    %c8_77 = arith.constant 8 : index
    %156 = vector.load %arg17[%c0_76, %c8_77] : memref<16x128xf32, #tpu.memory_space<vmem>>, vector<16x120xf32>
    tpu.vector_store %arg17[%c0_76, %c8_77], %155 {strides = array<i32>} : memref<16x128xf32, #tpu.memory_space<vmem>>, vector<16x120xf32>,
    return
  }
  func.func @transform_0(%arg0: i32) -> (i32, i32) {
    %c0_i32 = arith.constant 0 : i32
    %c0_i32_0 = arith.constant 0 : i32
    return %arg0, %c0_i32 : i32, i32
  }
  func.func @transform_1(%arg0: i32) -> (i32, i32) {
    %c0_i32 = arith.constant 0 : i32
    %c0_i32_0 = arith.constant 0 : i32
    return %arg0, %c0_i32 : i32, i32
  }
  func.func @transform_2(%arg0: i32) -> (i32, i32) {
    %c0_i32 = arith.constant 0 : i32
    %c0_i32_0 = arith.constant 0 : i32
    return %arg0, %c0_i32 : i32, i32
  }
  func.func @transform_3(%arg0: i32) -> (i32, i32) {
    %c0_i32 = arith.constant 0 : i32
    %c0_i32_0 = arith.constant 0 : i32
    %c0_i32_1 = arith.constant 0 : i32
    return %c0_i32, %c0_i32_0 : i32, i32
  }
  func.func @transform_4(%arg0: i32) -> (i32, i32) {
    %c0_i32 = arith.constant 0 : i32
    %c0_i32_0 = arith.constant 0 : i32
    %c0_i32_1 = arith.constant 0 : i32
    return %c0_i32, %c0_i32_0 : i32, i32
  }
  func.func @transform_5(%arg0: i32) -> (i32, i32) {
    %c0_i32 = arith.constant 0 : i32
    %c0_i32_0 = arith.constant 0 : i32
    %c0_i32_1 = arith.constant 0 : i32
    return %c0_i32, %c0_i32_0 : i32, i32
  }
  func.func @transform_6(%arg0: i32) -> (i32, i32) {
    %c0_i32 = arith.constant 0 : i32
    %c0_i32_0 = arith.constant 0 : i32
    %c0_i32_1 = arith.constant 0 : i32
    return %c0_i32, %c0_i32_0 : i32, i32
  }
  func.func @transform_7(%arg0: i32) -> (i32, i32) {
    %c0_i32 = arith.constant 0 : i32
    %c0_i32_0 = arith.constant 0 : i32
    %c0_i32_1 = arith.constant 0 : i32
    return %c0_i32, %c0_i32_0 : i32, i32
  }
  func.func @transform_8(%arg0: i32) -> (i32, i32) {
    %c0_i32 = arith.constant 0 : i32
    %c0_i32_0 = arith.constant 0 : i32
    %c0_i32_1 = arith.constant 0 : i32
    return %c0_i32, %c0_i32_0 : i32, i32
  }
  func.func @transform_9(%arg0: i32) -> (i32, i32) {
    %c0_i32 = arith.constant 0 : i32
    %c0_i32_0 = arith.constant 0 : i32
    %c0_i32_1 = arith.constant 0 : i32
    return %c0_i32, %c0_i32_0 : i32, i32
  }
  func.func @transform_10(%arg0: i32) -> (i32, i32) {
    %c0_i32 = arith.constant 0 : i32
    %c0_i32_0 = arith.constant 0 : i32
    %c0_i32_1 = arith.constant 0 : i32
    return %c0_i32, %c0_i32_0 : i32, i32
  }
  func.func @transform_11(%arg0: i32) -> (i32, i32) {
    %c0_i32 = arith.constant 0 : i32
    %c0_i32_0 = arith.constant 0 : i32
    %c0_i32_1 = arith.constant 0 : i32
    return %c0_i32, %c0_i32_0 : i32, i32
  }
  func.func @transform_12(%arg0: i32) -> (i32, i32) {
    %c0_i32 = arith.constant 0 : i32
    %c0_i32_0 = arith.constant 0 : i32
    %c0_i32_1 = arith.constant 0 : i32
    return %c0_i32, %c0_i32_0 : i32, i32
  }
  func.func @transform_13(%arg0: i32) -> (i32, i32) {
    %c0_i32 = arith.constant 0 : i32
    %c0_i32_0 = arith.constant 0 : i32
    %c0_i32_1 = arith.constant 0 : i32
    return %c0_i32, %c0_i32_0 : i32, i32
  }
  func.func @transform_14(%arg0: i32) -> (i32, i32) {
    %c0_i32 = arith.constant 0 : i32
    %c0_i32_0 = arith.constant 0 : i32
    %c0_i32_1 = arith.constant 0 : i32
    return %c0_i32, %c0_i32_0 : i32, i32
  }
  func.func @transform_15(%arg0: i32) -> (i32, i32) {
    %c0_i32 = arith.constant 0 : i32
    %c0_i32_0 = arith.constant 0 : i32
    return %arg0, %c0_i32 : i32, i32
  }
  func.func @transform_16(%arg0: i32) -> (i32, i32) {
    %c0_i32 = arith.constant 0 : i32
    %c0_i32_0 = arith.constant 0 : i32
    return %arg0, %c0_i32 : i32, i32
  }
}

</mosaic_0001>

<llo_original>
// kernel: tpu_custom_call.1
$region0: #{tpu_custom_call.1}
  #allocation0 [shape = 'u32[]', space=smem, size = 0x4, offset = 0x4, fixed_abs, tag = 'smem constant byte address 0x4 - core index']
  #allocation1 [shape = 'u32[144,128]{1,0:T(1,128)}', space=vmem, size = 0x12000, scoped, tag = 'internal scratch']
  #allocation2 [shape = 'f32[16,32]{1,0:T(8,128)}', space=vmem, size = 0x2000, scoped, tag = 'scratch operand']
  #allocation3 [shape = 'f32[16,32]{1,0:T(8,128)}', space=vmem, size = 0x2000, scoped, tag = 'scratch operand']
  #allocation4 [shape = 'f32[16,32]{1,0:T(8,128)}', space=vmem, size = 0x2000, scoped, tag = 'scratch operand']
  %s0 = inlined_call_operand.hbm [shape: f32[16,32], index: 0, kind: input, shape index: {}]
  %s1 = inlined_call_operand.hbm [shape: f32[16,32], index: 1, kind: input, shape index: {}]
  %s2 = inlined_call_operand.hbm [shape: bf16[16,32], index: 2, kind: input, shape index: {}]
  %s3 = inlined_call_operand.hbm [shape: f32[16,32], index: 3, kind: input, shape index: {}]
  %s4 = inlined_call_operand.hbm [shape: f32[16,32], index: 4, kind: input, shape index: {}]
  %s5 = inlined_call_operand.vmem [shape: f32[16,32], index: 5, kind: input, shape index: {}]
  %s6 = inlined_call_operand.hbm [shape: f32[16,32], index: 6, kind: input, shape index: {}]
  %s7 = inlined_call_operand.hbm [shape: bf16[32,32], index: 7, kind: input, shape index: {}]
  %s8 = inlined_call_operand.hbm [shape: bf16[32,32], index: 8, kind: input, shape index: {}]
  %s9 = inlined_call_operand.vmem [shape: bf16[32,32], index: 9, kind: input, shape index: {}]
  %s10 = inlined_call_operand.hbm [shape: bf16[32,32], index: 10, kind: input, shape index: {}]
  %s11 = inlined_call_operand.vmem [shape: f32[1,32], index: 11, kind: input, shape index: {}]
  %s12 = inlined_call_operand.vmem [shape: f32[1,32], index: 12, kind: input, shape index: {}]
  %s13 = inlined_call_operand.vmem [shape: f32[1,32], index: 13, kind: input, shape index: {}]
  %s14 = inlined_call_operand.vmem [shape: f32[1,32], index: 14, kind: input, shape index: {}]
  %s15 = inlined_call_operand.hbm [shape: f32[16,128], index: 15, kind: output, shape index: {0}]
  %s16 = inlined_call_operand.hbm [shape: f32[16,128], index: 16, kind: output, shape index: {1}]
  %17 = xla_tuple %s15, %s16
  %s18 = sld [smem:[#allocation0]]
  $region114: #{tpu_custom_call.1} parent=0
    _
  %s20 = ssub.s32 1, %s18
  %s21 = scalar_select 0, %s20, %s18
  $region1: #{tpu_custom_call.1} parent=0
    #allocation5 [shape = 'u8[8192]{0}', space=vmem, size = 0x2000, scoped, tag = 'input window, operand 0, single buffered']
    #allocation6 [shape = 's32[1]{0}', space=sflag, size = 0x4, scoped, tag = 'scoped memory for tpu_custom_call.1']
    #allocation7 [shape = 's32[1]{0}', space=sflag, size = 0x4, scoped, tag = 'scoped memory for tpu_custom_call.1']
    #allocation8 [shape = 'u8[8192]{0}', space=vmem, size = 0x2000, scoped, tag = 'input window, operand 1, single buffered']
    #allocation9 [shape = 's32[1]{0}', space=sflag, size = 0x4, scoped, tag = 'scoped memory for tpu_custom_call.1']
    #allocation10 [shape = 'u8[4096]{0}', space=vmem, size = 0x1000, scoped, tag = 'input window, operand 2, single buffered']
    #allocation11 [shape = 'u8[8192]{0}', space=vmem, size = 0x2000, scoped, tag = 'input window, operand 3, single buffered']
    #allocation12 [shape = 's32[1]{0}', space=sflag, size = 0x4, scoped, tag = 'scoped memory for tpu_custom_call.1']
    #allocation13 [shape = 'u8[8192]{0}', space=vmem, size = 0x2000, scoped, tag = 'input window, operand 4, single buffered']
    #allocation14 [shape = 'u8[8192]{0}', space=vmem, size = 0x2000, scoped, tag = 'input window, operand 6, single buffered']
    #allocation15 [shape = 's32[1]{0}', space=sflag, size = 0x4, scoped, tag = 'scoped memory for tpu_custom_call.1']
    #allocation16 [shape = 'u8[8192]{0}', space=vmem, size = 0x2000, scoped, tag = 'input window, operand 7, single buffered']
    #allocation17 [shape = 'u8[8192]{0}', space=vmem, size = 0x2000, scoped, tag = 'input window, operand 8, single buffered']
    #allocation18 [shape = 's32[1]{0}', space=sflag, size = 0x4, scoped, tag = 'scoped memory for tpu_custom_call.1']
    #allocation19 [shape = 'u8[8192]{0}', space=vmem, size = 0x2000, scoped, tag = 'input window, operand 10, single buffered']
    #allocation20 [shape = 'u8[8192]{0}', space=vmem, size = 0x2000, scoped, tag = 'output window, operand 0, single buffered']
    #allocation21 [shape = 'u8[8192]{0}', space=vmem, size = 0x2000, scoped, tag = 'output window, operand 1, single buffered']
    #allocation22 [shape = 's32[1]{0}', space=sflag, size = 0x4, scoped, tag = 'scoped memory for tpu_custom_call.1']
    %22 = vsyncpa [#allocation6], 0
    %23 = vsyncpa [#allocation9], 0
    %24 = vsyncpa [#allocation12], 0
    %25 = vsyncpa [#allocation15], 0
    %26 = vsyncpa [#allocation18], 0
    %27 = vsyncpa [#allocation7], 0
    %28 = vsyncpa [#allocation22], 0
    // Predicated region
    $region2: #{tpu_custom_call.1} parent=1 // pred_check
      _
    $region3: #{tpu_custom_call.1} parent=1 // pred_check_branch
      %30 = sbr.rel (0) target = $region5
    $region4: #{tpu_custom_call.1} parent=1 // pred_region
      %s32 = ssub.s32 256, 256
      %33 = vsyncadd [#allocation6], %s32
      %s34 = sshll.u32 [#allocation5], 4
      %s35 = int_to_ptr.vmem [resolvable:$true] %s34
      %40 = dma.hbm_to_vmem [thread:$0]  %s0, 256, %s35, [#allocation6], 128, 128, 8
    $region5: #{tpu_custom_call.1} parent=1 // pred_fallthru
      _
    // Predicated region
    $region6: #{tpu_custom_call.1} parent=1 // pred_check
      _
    $region7: #{tpu_custom_call.1} parent=1 // pred_check_branch
      %42 = sbr.rel (0) target = $region9
    $region8: #{tpu_custom_call.1} parent=1 // pred_region
      %s44 = ssub.s32 256, 256
      %45 = vsyncadd [#allocation9], %s44
      %s46 = sshll.u32 [#allocation8], 4
      %s47 = int_to_ptr.vmem [resolvable:$true] %s46
      %52 = dma.hbm_to_vmem [thread:$0]  %s1, 256, %s47, [#allocation9], 128, 128, 8
    $region9: #{tpu_custom_call.1} parent=1 // pred_fallthru
      _
    // Predicated region
    $region10: #{tpu_custom_call.1} parent=1 // pred_check
      _
    $region11: #{tpu_custom_call.1} parent=1 // pred_check_branch
      %54 = sbr.rel (0) target = $region13
    $region12: #{tpu_custom_call.1} parent=1 // pred_region
      %s56 = ssub.s32 128, 128
      %57 = vsyncadd [#allocation9], %s56
      %s58 = sshll.u32 [#allocation10], 4
      %s59 = int_to_ptr.vmem [resolvable:$true] %s58
      %64 = dma.hbm_to_vmem [thread:$0]  %s2, 128, %s59, [#allocation9], 64, 64, 4
    $region13: #{tpu_custom_call.1} parent=1 // pred_fallthru
      _
    // Predicated region
    $region14: #{tpu_custom_call.1} parent=1 // pred_check
      _
    $region15: #{tpu_custom_call.1} parent=1 // pred_check_branch
      %66 = sbr.rel (0) target = $region17
    $region16: #{tpu_custom_call.1} parent=1 // pred_region
      %s68 = ssub.s32 256, 256
      %69 = vsyncadd [#allocation12], %s68
      %s70 = sshll.u32 [#allocation11], 4
      %s71 = int_to_ptr.vmem [resolvable:$true] %s70
      %76 = dma.hbm_to_vmem [thread:$0]  %s3, 256, %s71, [#allocation12], 128, 128, 8
    $region17: #{tpu_custom_call.1} parent=1 // pred_fallthru
      _
    // Predicated region
    $region18: #{tpu_custom_call.1} parent=1 // pred_check
      _
    $region19: #{tpu_custom_call.1} parent=1 // pred_check_branch
      %78 = sbr.rel (0) target = $region21
    $region20: #{tpu_custom_call.1} parent=1 // pred_region
      %s80 = ssub.s32 256, 256
      %81 = vsyncadd [#allocation12], %s80
      %s82 = sshll.u32 [#allocation13], 4
      %s83 = int_to_ptr.vmem [resolvable:$true] %s82
      %88 = dma.hbm_to_vmem [thread:$0]  %s4, 256, %s83, [#allocation12], 128, 128, 8
    $region21: #{tpu_custom_call.1} parent=1 // pred_fallthru
      _
    // Predicated region
    $region22: #{tpu_custom_call.1} parent=1 // pred_check
      _
    $region23: #{tpu_custom_call.1} parent=1 // pred_check_branch
      %90 = sbr.rel (0) target = $region25
    $region24: #{tpu_custom_call.1} parent=1 // pred_region
      _
    $region25: #{tpu_custom_call.1} parent=1 // pred_fallthru
      _
    // Predicated region
    $region26: #{tpu_custom_call.1} parent=1 // pred_check
      _
    $region27: #{tpu_custom_call.1} parent=1 // pred_check_branch
      %92 = sbr.rel (0) target = $region29
    $region28: #{tpu_custom_call.1} parent=1 // pred_region
      %s94 = ssub.s32 256, 256
      %95 = vsyncadd [#allocation15], %s94
      %s96 = sshll.u32 [#allocation14], 4
      %s97 = int_to_ptr.vmem [resolvable:$true] %s96
      %102 = dma.hbm_to_vmem [thread:$0]  %s6, 256, %s97, [#allocation15], 128, 128, 8
    $region29: #{tpu_custom_call.1} parent=1 // pred_fallthru
      _
    // Predicated region
    $region30: #{tpu_custom_call.1} parent=1 // pred_check
      _
    $region31: #{tpu_custom_call.1} parent=1 // pred_check_branch
      %104 = sbr.rel (0) target = $region33
    $region32: #{tpu_custom_call.1} parent=1 // pred_region
      %s106 = ssub.s32 256, 256
      %107 = vsyncadd [#allocation15], %s106
      %s108 = sshll.u32 [#allocation16], 4
      %s109 = int_to_ptr.vmem [resolvable:$true] %s108
      %114 = dma.hbm_to_vmem [thread:$0]  %s7, 256, %s109, [#allocation15], 64, 64, 4
    $region33: #{tpu_custom_call.1} parent=1 // pred_fallthru
      _
    // Predicated region
    $region34: #{tpu_custom_call.1} parent=1 // pred_check
      _
    $region35: #{tpu_custom_call.1} parent=1 // pred_check_branch
      %116 = sbr.rel (0) target = $region37
    $region36: #{tpu_custom_call.1} parent=1 // pred_region
      %s118 = ssub.s32 256, 256
      %119 = vsyncadd [#allocation18], %s118
      %s120 = sshll.u32 [#allocation17], 4
      %s121 = int_to_ptr.vmem [resolvable:$true] %s120
      %126 = dma.hbm_to_vmem [thread:$0]  %s8, 256, %s121, [#allocation18], 64, 64, 4
    $region37: #{tpu_custom_call.1} parent=1 // pred_fallthru
      _
    // Predicated region
    $region38: #{tpu_custom_call.1} parent=1 // pred_check
      _
    $region39: #{tpu_custom_call.1} parent=1 // pred_check_branch
      %128 = sbr.rel (0) target = $region41
    $region40: #{tpu_custom_call.1} parent=1 // pred_region
      _
    $region41: #{tpu_custom_call.1} parent=1 // pred_fallthru
      _
    // Predicated region
    $region42: #{tpu_custom_call.1} parent=1 // pred_check
      _
    $region43: #{tpu_custom_call.1} parent=1 // pred_check_branch
      %130 = sbr.rel (0) target = $region45
    $region44: #{tpu_custom_call.1} parent=1 // pred_region
      %s132 = ssub.s32 256, 256
      %133 = vsyncadd [#allocation18], %s132
      %s134 = sshll.u32 [#allocation19], 4
      %s135 = int_to_ptr.vmem [resolvable:$true] %s134
      %140 = dma.hbm_to_vmem [thread:$0]  %s10, 256, %s135, [#allocation18], 64, 64, 4
    $region45: #{tpu_custom_call.1} parent=1 // pred_fallthru
      _
    // Predicated region
    $region46: #{tpu_custom_call.1} parent=1 // pred_check
      _
    $region47: #{tpu_custom_call.1} parent=1 // pred_check_branch
      %142 = sbr.rel (0) target = $region49
    $region48: #{tpu_custom_call.1} parent=1 // pred_region
      _
    $region49: #{tpu_custom_call.1} parent=1 // pred_fallthru
      _
    // Predicated region
    $region50: #{tpu_custom_call.1} parent=1 // pred_check
      _
    $region51: #{tpu_custom_call.1} parent=1 // pred_check_branch
      %144 = sbr.rel (0) target = $region53
    $region52: #{tpu_custom_call.1} parent=1 // pred_region
      _
    $region53: #{tpu_custom_call.1} parent=1 // pred_fallthru
      _
    // Predicated region
    $region54: #{tpu_custom_call.1} parent=1 // pred_check
      _
    $region55: #{tpu_custom_call.1} parent=1 // pred_check_branch
      %146 = sbr.rel (0) target = $region57
    $region56: #{tpu_custom_call.1} parent=1 // pred_region
      _
    $region57: #{tpu_custom_call.1} parent=1 // pred_fallthru
      _
    // Predicated region
    $region58: #{tpu_custom_call.1} parent=1 // pred_check
      _
    $region59: #{tpu_custom_call.1} parent=1 // pred_check_branch
      %148 = sbr.rel (0) target = $region61
    $region60: #{tpu_custom_call.1} parent=1 // pred_region
      _
    $region61: #{tpu_custom_call.1} parent=1 // pred_fallthru
      _
    // Predicated region
    $region62: #{tpu_custom_call.1} parent=1 // pred_check
      _
    $region63: #{tpu_custom_call.1} parent=1 // pred_check_branch
      %150 = sbr.rel (0) target = $region65
    $region64: #{tpu_custom_call.1} parent=1 // pred_region
      %151 = dma.done [#allocation6], 256
    $region65: #{tpu_custom_call.1} parent=1 // pred_fallthru
      _
    // Predicated region
    $region66: #{tpu_custom_call.1} parent=1 // pred_check
      _
    $region67: #{tpu_custom_call.1} parent=1 // pred_check_branch
      %153 = sbr.rel (0) target = $region69
    $region68: #{tpu_custom_call.1} parent=1 // pred_region
      %154 = dma.done [#allocation9], 256
    $region69: #{tpu_custom_call.1} parent=1 // pred_fallthru
      _
    // Predicated region
    $region70: #{tpu_custom_call.1} parent=1 // pred_check
      _
    $region71: #{tpu_custom_call.1} parent=1 // pred_check_branch
      %156 = sbr.rel (0) target = $region73
    $region72: #{tpu_custom_call.1} parent=1 // pred_region
      %157 = dma.done [#allocation9], 128
    $region73: #{tpu_custom_call.1} parent=1 // pred_fallthru
      _
    // Predicated region
    $region74: #{tpu_custom_call.1} parent=1 // pred_check
      _
    $region75: #{tpu_custom_call.1} parent=1 // pred_check_branch
      %159 = sbr.rel (0) target = $region77
    $region76: #{tpu_custom_call.1} parent=1 // pred_region
      %160 = dma.done [#allocation12], 256
    $region77: #{tpu_custom_call.1} parent=1 // pred_fallthru
      _
    // Predicated region
    $region78: #{tpu_custom_call.1} parent=1 // pred_check
      _
    $region79: #{tpu_custom_call.1} parent=1 // pred_check_branch
      %162 = sbr.rel (0) target = $region81
    $region80: #{tpu_custom_call.1} parent=1 // pred_region
      %163 = dma.done [#allocation12], 256
    $region81: #{tpu_custom_call.1} parent=1 // pred_fallthru
      _
    // Predicated region
    $region82: #{tpu_custom_call.1} parent=1 // pred_check
      _
    $region83: #{tpu_custom_call.1} parent=1 // pred_check_branch
      %165 = sbr.rel (0) target = $region85
    $region84: #{tpu_custom_call.1} parent=1 // pred_region
      %166 = dma.done [#allocation15], 256
    $region85: #{tpu_custom_call.1} parent=1 // pred_fallthru
      _
    // Predicated region
    $region86: #{tpu_custom_call.1} parent=1 // pred_check
      _
    $region87: #{tpu_custom_call.1} parent=1 // pred_check_branch
      %168 = sbr.rel (0) target = $region89
    $region88: #{tpu_custom_call.1} parent=1 // pred_region
      %169 = dma.done [#allocation15], 256
    $region89: #{tpu_custom_call.1} parent=1 // pred_fallthru
      _
    // Predicated region
    $region90: #{tpu_custom_call.1} parent=1 // pred_check
      _
    $region91: #{tpu_custom_call.1} parent=1 // pred_check_branch
      %171 = sbr.rel (0) target = $region93
    $region92: #{tpu_custom_call.1} parent=1 // pred_region
      %172 = dma.done [#allocation18], 256
    $region93: #{tpu_custom_call.1} parent=1 // pred_fallthru
      _
    // Predicated region
    $region94: #{tpu_custom_call.1} parent=1 // pred_check
      _
    $region95: #{tpu_custom_call.1} parent=1 // pred_check_branch
      %174 = sbr.rel (0) target = $region97
    $region96: #{tpu_custom_call.1} parent=1 // pred_region
      %175 = dma.done [#allocation18], 256
    $region97: #{tpu_custom_call.1} parent=1 // pred_fallthru
      _
    %v177 = vld [vmem:[#allocation5] sm:$0xff]
    %v178 = vld [vmem:[#allocation5 + $0x8] sm:$0xff]
    %v179 = vld [vmem:[#allocation8] sm:$0xff]
    %v180 = vld [vmem:[#allocation8 + $0x8] sm:$0xff]
    %183 = vrot.lane.b32.xlu0 %v177, 112
    %v184 = vpop.permute.xlu0 %183
    %185 = vrot.lane.b32.xlu0 %v178, 112
    %v186 = vpop.permute.xlu0 %185
    %vm189 = vcmask 130048
    %190 = vst.msk [vmem:[#allocation2] sm:$0xff] %vm189, %v184
    %191 = vst.msk [vmem:[#allocation2 + $0x8] sm:$0xff] %vm189, %v186
    %192 = vrot.lane.b32.xlu0 %v177, 16
    %v193 = vpop.permute.xlu0 %192
    %194 = vrot.lane.b32.xlu0 %v178, 16
    %v195 = vpop.permute.xlu0 %194
    %vm198 = vcmask 261248
    %199 = vst.msk [vmem:[#allocation2] sm:$0xff] %vm198, %v193
    %200 = vst.msk [vmem:[#allocation2 + $0x8] sm:$0xff] %vm198, %v195
    %203 = vrot.lane.b32.xlu0 %v179, 112
    %v204 = vpop.permute.xlu0 %203
    %205 = vrot.lane.b32.xlu0 %v180, 112
    %v206 = vpop.permute.xlu0 %205
    %209 = vst.msk [vmem:[#allocation3] sm:$0xff] %vm189, %v204
    %210 = vst.msk [vmem:[#allocation3 + $0x8] sm:$0xff] %vm189, %v206
    %211 = vrot.lane.b32.xlu0 %v179, 16
    %v212 = vpop.permute.xlu0 %211
    %213 = vrot.lane.b32.xlu0 %v180, 16
    %v214 = vpop.permute.xlu0 %213
    %217 = vst.msk [vmem:[#allocation3] sm:$0xff] %vm198, %v212
    %218 = vst.msk [vmem:[#allocation3 + $0x8] sm:$0xff] %vm198, %v214
    %v219 = vld [vmem:[#allocation11] sm:$0xff]
    %v220 = vld [vmem:[#allocation11 + $0x8] sm:$0xff]
    %v221 = vmul.f32 %v177, %v219
    %v222 = vmul.f32 %v178, %v220
    %v223 = vld [vmem:[#allocation2] sm:$0xff]
    %v224 = vld [vmem:[#allocation2 + $0x8] sm:$0xff]
    %v225 = vld [vmem:[#allocation13] sm:$0xff]
    %v226 = vld [vmem:[#allocation13 + $0x8] sm:$0xff]
    %v227 = vmul.f32 %v223, %v225
    %v228 = vmul.f32 %v224, %v226
    %v229 = vadd.f32 %v221, %v227
    %v230 = vadd.f32 %v222, %v228
    %v231 = vld [vmem:[%s5] sm:$0xff]
    %v232 = vld [vmem:[%s5 + $0x8] sm:$0xff]
    %v233 = vmul.f32 %v179, %v231
    %v234 = vmul.f32 %v180, %v232
    %v235 = vld [vmem:[#allocation3] sm:$0xff]
    %v236 = vld [vmem:[#allocation3 + $0x8] sm:$0xff]
    %v237 = vld [vmem:[#allocation14] sm:$0xff]
    %v238 = vld [vmem:[#allocation14 + $0x8] sm:$0xff]
    %v239 = vmul.f32 %v235, %v237
    %v240 = vmul.f32 %v236, %v238
    %v241 = vadd.f32 %v233, %v239
    %v242 = vadd.f32 %v234, %v240
    %v243 = vpack.c.bf16 %v230, %v229
    %v244 = vld [vmem:[#allocation16] sm:$0xf]
    %v245 = vld [vmem:[#allocation16 + $0x4] sm:$0xf]
    %v246 = vld [vmem:[#allocation16 + $0x8] sm:$0xf]
    %v247 = vld [vmem:[#allocation16 + $0xc] sm:$0xf]
    %v248 = vld [vmem:[%s11] sm:$0x1]
    %v250 = vlaneseq
    %v251 = vshrl.u32 %v250, 7
    %v252 = vsub.s32 0, %v251
    %v253 = vrot.slane %v248, %v252
    %v259 = vunpack.c.l.b16 %v244
    %v260 = vunpack.c.l.b16 %v245
    %v261 = vunpack.c.l.b16 %v246
    %v262 = vunpack.c.l.b16 %v247
    %v263 = vpack.c.b16 %v260, %v259
    %v264 = vpack.c.b16 %v262, %v261
    %vm267 = vcmask 261120
    %v269 = vsel %vm267, %v243, 0
    %271 = vmatprep.subr.bf16.mxu0 0
    %272 = vmatpush1.bf16.msra.mxu0 %v263
    %273 = vmatprep.subr.bf16.mxu0 0
    %274 = vmatpush1.bf16.msra.mxu0 %v264
    %275 = vmatprep.subr.bf16.mxu0 0
    %276 = vmatpush1.bf16.msra.mxu0 0
    %277 = vmatprep.subr.bf16.mxu0 0
    %278 = vmatpush1.bf16.msra.mxu0 0
    %279 = vmatprep.subr.bf16.mxu0 0
    %280 = vmatpush1.bf16.msra.mxu0 0
    %281 = vmatprep.subr.bf16.mxu0 0
    %282 = vmatpush1.bf16.msra.mxu0 0
    %283 = vmatprep.subr.bf16.mxu0 0
    %284 = vmatpush1.bf16.msra.mxu0 0
    %285 = vmatprep.subr.bf16.mxu0 0
    %286 = vmatpush1.bf16.msra.mxu0 0
    %287 = vmatprep.subr.bf16.mxu0 0
    %288 = vmatpush1.bf16.msra.mxu0 0
    %289 = vmatprep.subr.bf16.mxu0 0
    %290 = vmatpush1.bf16.msra.mxu0 0
    %291 = vmatprep.subr.bf16.mxu0 0
    %292 = vmatpush1.bf16.msra.mxu0 0
    %293 = vmatprep.subr.bf16.mxu0 0
    %294 = vmatpush1.bf16.msra.mxu0 0
    %295 = vmatprep.subr.bf16.mxu0 0
    %296 = vmatpush1.bf16.msra.mxu0 0
    %297 = vmatprep.subr.bf16.mxu0 0
    %298 = vmatpush1.bf16.msra.mxu0 0
    %299 = vmatprep.subr.bf16.mxu0 0
    %300 = vmatpush1.bf16.msra.mxu0 0
    %301 = vmatprep.subr.bf16.mxu0 0
    %302 = vmatpush1.bf16.msra.mxu0 0
    %303 = vmatprep.mubr.bf16.mxu0 0
    %304 = vmatmul.mubr.bf16.gmra.mrb[0].mxu0 %v269
    %v305 = vpop.f32.mrb[0].mxu0
    %v306 = vadd.f32 %v253, %v305
    %v307 = vpop.f32.mrb[0].mxu0
    %v308 = vpop.f32.mrb[0].mxu0
    %v309 = vadd.f32 %v253, %v308
    %v310 = vpop.f32.mrb[0].mxu0
    %311 = vdwg.mxu0
    %v312 = vpack.c.bf16 %v242, %v241
    %v313 = vld [vmem:[#allocation17] sm:$0xf]
    %v314 = vld [vmem:[#allocation17 + $0x4] sm:$0xf]
    %v315 = vld [vmem:[#allocation17 + $0x8] sm:$0xf]
    %v316 = vld [vmem:[#allocation17 + $0xc] sm:$0xf]
    %v317 = vld [vmem:[%s12] sm:$0x1]
    %v319 = vlaneseq
    %v320 = vshrl.u32 %v319, 7
    %v321 = vsub.s32 0, %v320
    %v322 = vrot.slane %v317, %v321
    %v328 = vunpack.c.l.b16 %v313
    %v329 = vunpack.c.l.b16 %v314
    %v330 = vunpack.c.l.b16 %v315
    %v331 = vunpack.c.l.b16 %v316
    %v332 = vpack.c.b16 %v329, %v328
    %v333 = vpack.c.b16 %v331, %v330
    %v337 = vsel %vm267, %v312, 0
    %339 = vmatprep.subr.bf16.mxu0 0
    %340 = vmatpush1.bf16.msra.mxu0 %v332
    %341 = vmatprep.subr.bf16.mxu0 0
    %342 = vmatpush1.bf16.msra.mxu0 %v333
    %343 = vmatprep.subr.bf16.mxu0 0
    %344 = vmatpush1.bf16.msra.mxu0 0
    %345 = vmatprep.subr.bf16.mxu0 0
    %346 = vmatpush1.bf16.msra.mxu0 0
    %347 = vmatprep.subr.bf16.mxu0 0
    %348 = vmatpush1.bf16.msra.mxu0 0
    %349 = vmatprep.subr.bf16.mxu0 0
    %350 = vmatpush1.bf16.msra.mxu0 0
    %351 = vmatprep.subr.bf16.mxu0 0
    %352 = vmatpush1.bf16.msra.mxu0 0
    %353 = vmatprep.subr.bf16.mxu0 0
    %354 = vmatpush1.bf16.msra.mxu0 0
    %355 = vmatprep.subr.bf16.mxu0 0
    %356 = vmatpush1.bf16.msra.mxu0 0
    %357 = vmatprep.subr.bf16.mxu0 0
    %358 = vmatpush1.bf16.msra.mxu0 0
    %359 = vmatprep.subr.bf16.mxu0 0
    %360 = vmatpush1.bf16.msra.mxu0 0
    %361 = vmatprep.subr.bf16.mxu0 0
    %362 = vmatpush1.bf16.msra.mxu0 0
    %363 = vmatprep.subr.bf16.mxu0 0
    %364 = vmatpush1.bf16.msra.mxu0 0
    %365 = vmatprep.subr.bf16.mxu0 0
    %366 = vmatpush1.bf16.msra.mxu0 0
    %367 = vmatprep.subr.bf16.mxu0 0
    %368 = vmatpush1.bf16.msra.mxu0 0
    %369 = vmatprep.subr.bf16.mxu0 0
    %370 = vmatpush1.bf16.msra.mxu0 0
    %371 = vmatprep.mubr.bf16.mxu0 0
    %372 = vmatmul.mubr.bf16.gmra.mrb[0].mxu0 %v337
    %v373 = vpop.f32.mrb[0].mxu0
    %v374 = vadd.f32 %v322, %v373
    %v375 = vpop.f32.mrb[0].mxu0
    %v376 = vpop.f32.mrb[0].mxu0
    %v377 = vadd.f32 %v322, %v376
    %v378 = vpop.f32.mrb[0].mxu0
    %379 = vdwg.mxu0
    %v380 = vld [vmem:[#allocation10] sm:$0xf]
    %v381 = vld [vmem:[#allocation10 + $0x4] sm:$0xf]
    %v382 = vld [vmem:[%s9] sm:$0xf]
    %v383 = vld [vmem:[%s9 + $0x4] sm:$0xf]
    %v384 = vld [vmem:[%s9 + $0x8] sm:$0xf]
    %v385 = vld [vmem:[%s9 + $0xc] sm:$0xf]
    %v386 = vld [vmem:[%s13] sm:$0x1]
    %v388 = vlaneseq
    %v389 = vshrl.u32 %v388, 7
    %v390 = vsub.s32 0, %v389
    %v391 = vrot.slane %v386, %v390
    %v395 = vunpack.c.l.b16 %v380
    %v396 = vunpack.c.l.b16 %v381
    %v397 = vpack.c.b16 %v396, %v395
    %v402 = vunpack.c.l.b16 %v382
    %v403 = vunpack.c.l.b16 %v383
    %v404 = vunpack.c.l.b16 %v384
    %v405 = vunpack.c.l.b16 %v385
    %v406 = vpack.c.b16 %v403, %v402
    %v407 = vpack.c.b16 %v405, %v404
    %v411 = vsel %vm267, %v397, 0
    %413 = vmatprep.subr.bf16.mxu0 0
    %414 = vmatpush1.bf16.msra.mxu0 %v406
    %415 = vmatprep.subr.bf16.mxu0 0
    %416 = vmatpush1.bf16.msra.mxu0 %v407
    %417 = vmatprep.subr.bf16.mxu0 0
    %418 = vmatpush1.bf16.msra.mxu0 0
    %419 = vmatprep.subr.bf16.mxu0 0
    %420 = vmatpush1.bf16.msra.mxu0 0
    %421 = vmatprep.subr.bf16.mxu0 0
    %422 = vmatpush1.bf16.msra.mxu0 0
    %423 = vmatprep.subr.bf16.mxu0 0
    %424 = vmatpush1.bf16.msra.mxu0 0
    %425 = vmatprep.subr.bf16.mxu0 0
    %426 = vmatpush1.bf16.msra.mxu0 0
    %427 = vmatprep.subr.bf16.mxu0 0
    %428 = vmatpush1.bf16.msra.mxu0 0
    %429 = vmatprep.subr.bf16.mxu0 0
    %430 = vmatpush1.bf16.msra.mxu0 0
    %431 = vmatprep.subr.bf16.mxu0 0
    %432 = vmatpush1.bf16.msra.mxu0 0
    %433 = vmatprep.subr.bf16.mxu0 0
    %434 = vmatpush1.bf16.msra.mxu0 0
    %435 = vmatprep.subr.bf16.mxu0 0
    %436 = vmatpush1.bf16.msra.mxu0 0
    %437 = vmatprep.subr.bf16.mxu0 0
    %438 = vmatpush1.bf16.msra.mxu0 0
    %439 = vmatprep.subr.bf16.mxu0 0
    %440 = vmatpush1.bf16.msra.mxu0 0
    %441 = vmatprep.subr.bf16.mxu0 0
    %442 = vmatpush1.bf16.msra.mxu0 0
    %443 = vmatprep.subr.bf16.mxu0 0
    %444 = vmatpush1.bf16.msra.mxu0 0
    %445 = vmatprep.mubr.bf16.mxu0 0
    %446 = vmatmul.mubr.bf16.gmra.mrb[0].mxu0 %v411
    %v447 = vpop.f32.mrb[0].mxu0
    %v448 = vadd.f32 %v391, %v447
    %v449 = vpop.f32.mrb[0].mxu0
    %v450 = vpop.f32.mrb[0].mxu0
    %v451 = vadd.f32 %v391, %v450
    %v452 = vpop.f32.mrb[0].mxu0
    %453 = vdwg.mxu0
    %v454 = vpack.c.bf16 %v306, %v306
    %v455 = vpack.c.bf16 %v309, %v309
    %v456 = vpack.c.bf16 %v374, %v374
    %v457 = vpack.c.bf16 %v377, %v377
    %v458 = vpack.c.bf16 %v448, %v448
    %v459 = vpack.c.bf16 %v451, %v451
    %vm460 = vcmask 64512
    %v462 = vsel %vm460, %v454, 0
    %v465 = vsel %vm460, %v456, 0
    %467 = vmatprep.subr.bf16.mxu0 0
    %468 = vmatpush1.bf16.xpose.msra.mxu0 %v465
    %469 = vmatprep.subr.bf16.mxu0 0
    %470 = vmatpush1.bf16.xpose.msra.mxu0 0
    %471 = vmatprep.subr.bf16.mxu0 0
    %472 = vmatpush1.bf16.xpose.msra.mxu0 0
    %473 = vmatprep.subr.bf16.mxu0 0
    %474 = vmatpush1.bf16.xpose.msra.mxu0 0
    %475 = vmatprep.subr.bf16.mxu0 0
    %476 = vmatpush1.bf16.xpose.msra.mxu0 0
    %477 = vmatprep.subr.bf16.mxu0 0
    %478 = vmatpush1.bf16.xpose.msra.mxu0 0
    %479 = vmatprep.subr.bf16.mxu0 0
    %480 = vmatpush1.bf16.xpose.msra.mxu0 0
    %481 = vmatprep.subr.bf16.mxu0 0
    %482 = vmatpush1.bf16.xpose.msra.mxu0 0
    %483 = vmatprep.subr.bf16.mxu0 0
    %484 = vmatpush1.bf16.xpose.msra.mxu0 0
    %485 = vmatprep.subr.bf16.mxu0 0
    %486 = vmatpush1.bf16.xpose.msra.mxu0 0
    %487 = vmatprep.subr.bf16.mxu0 0
    %488 = vmatpush1.bf16.xpose.msra.mxu0 0
    %489 = vmatprep.subr.bf16.mxu0 0
    %490 = vmatpush1.bf16.xpose.msra.mxu0 0
    %491 = vmatprep.subr.bf16.mxu0 0
    %492 = vmatpush1.bf16.xpose.msra.mxu0 0
    %493 = vmatprep.subr.bf16.mxu0 0
    %494 = vmatpush1.bf16.xpose.msra.mxu0 0
    %495 = vmatprep.subr.bf16.mxu0 0
    %496 = vmatpush1.bf16.xpose.msra.mxu0 0
    %497 = vmatprep.subr.bf16.mxu0 0
    %498 = vmatpush1.bf16.xpose.msra.mxu0 0
    %499 = vmatprep.mubr.bf16.mxu0 0
    %500 = vmatmul.mubr.bf16.gmra.mrb[0].mxu0 %v462
    %v501 = vpop.f32.mrb[0].mxu0
    %v502 = vadd.f32 0.0, %v501
    %v503 = vpop.f32.mrb[0].mxu0
    %v504 = vpop.f32.mrb[0].mxu0
    %v505 = vpop.f32.mrb[0].mxu0
    %506 = vdwg.mxu0
    %v508 = vsel %vm460, %v455, 0
    %v511 = vsel %vm460, %v457, 0
    %513 = vmatprep.subr.bf16.mxu0 0
    %514 = vmatpush1.bf16.xpose.msra.mxu0 %v511
    %515 = vmatprep.subr.bf16.mxu0 0
    %516 = vmatpush1.bf16.xpose.msra.mxu0 0
    %517 = vmatprep.subr.bf16.mxu0 0
    %518 = vmatpush1.bf16.xpose.msra.mxu0 0
    %519 = vmatprep.subr.bf16.mxu0 0
    %520 = vmatpush1.bf16.xpose.msra.mxu0 0
    %521 = vmatprep.subr.bf16.mxu0 0
    %522 = vmatpush1.bf16.xpose.msra.mxu0 0
    %523 = vmatprep.subr.bf16.mxu0 0
    %524 = vmatpush1.bf16.xpose.msra.mxu0 0
    %525 = vmatprep.subr.bf16.mxu0 0
    %526 = vmatpush1.bf16.xpose.msra.mxu0 0
    %527 = vmatprep.subr.bf16.mxu0 0
    %528 = vmatpush1.bf16.xpose.msra.mxu0 0
    %529 = vmatprep.subr.bf16.mxu0 0
    %530 = vmatpush1.bf16.xpose.msra.mxu0 0
    %531 = vmatprep.subr.bf16.mxu0 0
    %532 = vmatpush1.bf16.xpose.msra.mxu0 0
    %533 = vmatprep.subr.bf16.mxu0 0
    %534 = vmatpush1.bf16.xpose.msra.mxu0 0
    %535 = vmatprep.subr.bf16.mxu0 0
    %536 = vmatpush1.bf16.xpose.msra.mxu0 0
    %537 = vmatprep.subr.bf16.mxu0 0
    %538 = vmatpush1.bf16.xpose.msra.mxu0 0
    %539 = vmatprep.subr.bf16.mxu0 0
    %540 = vmatpush1.bf16.xpose.msra.mxu0 0
    %541 = vmatprep.subr.bf16.mxu0 0
    %542 = vmatpush1.bf16.xpose.msra.mxu0 0
    %543 = vmatprep.subr.bf16.mxu0 0
    %544 = vmatpush1.bf16.xpose.msra.mxu0 0
    %545 = vmatprep.mubr.bf16.mxu0 0
    %546 = vmatmul.mubr.bf16.gmra.mrb[0].mxu0 %v508
    %v547 = vpop.f32.mrb[0].mxu0
    %v548 = vadd.f32 0.0, %v547
    %v549 = vpop.f32.mrb[0].mxu0
    %v550 = vpop.f32.mrb[0].mxu0
    %v551 = vpop.f32.mrb[0].mxu0
    %552 = vdwg.mxu0
    %v553 = vsel %vm460, %v502, -inf
    %554 = vmax.xlane.f32.xlu0 %v553
    %v555 = vpop.xlane.xlu0 %554
    %v556 = vsel %vm460, %v548, -inf
    %557 = vmax.xlane.f32.xlu0 %v556
    %v558 = vpop.xlane.xlu0 %557
    %v559 = vsub.f32 %v502, %v555
    %v560 = vsub.f32 %v548, %v558
    %v561 = vmul.f32 %v559, 1.442695
    %v562 = vpow.pop %v561
    %v563 = vmul.f32 %v560, 1.442695
    %v564 = vpow.pop %v563
    %v565 = vsel %vm460, %v562, 0.0
    %566 = vadd.xlane.f32.xlu0 %v565
    %v567 = vpop.xlane.xlu0 %566
    %v568 = vsel %vm460, %v564, 0.0
    %569 = vadd.xlane.f32.xlu0 %v568
    %v570 = vpop.xlane.xlu0 %569
    %v571 = vrcp.pop %v567
    %v572 = vrcp.pop %v570
    %v573 = vmul.f32 %v562, %v571
    %v574 = vmul.f32 %v564, %v572
    %v575 = vadd.f32 %v573, 0.0
    %v576 = vadd.f32 %v574, 0.0
    %v577 = vpack.c.bf16 %v573, %v573
    %v578 = vpack.c.bf16 %v574, %v574
    %v580 = vsel %vm460, %v577, 0
    %vm582 = vcmask 1043456
    %v584 = vsel %vm582, %v458, 0
    %586 = vmatprep.subr.bf16.mxu0 0
    %587 = vmatpush1.bf16.msra.mxu0 %v584
    %588 = vmatprep.subr.bf16.mxu0 0
    %589 = vmatpush1.bf16.msra.mxu0 0
    %590 = vmatprep.subr.bf16.mxu0 0
    %591 = vmatpush1.bf16.msra.mxu0 0
    %592 = vmatprep.subr.bf16.mxu0 0
    %593 = vmatpush1.bf16.msra.mxu0 0
    %594 = vmatprep.subr.bf16.mxu0 0
    %595 = vmatpush1.bf16.msra.mxu0 0
    %596 = vmatprep.subr.bf16.mxu0 0
    %597 = vmatpush1.bf16.msra.mxu0 0
    %598 = vmatprep.subr.bf16.mxu0 0
    %599 = vmatpush1.bf16.msra.mxu0 0
    %600 = vmatprep.subr.bf16.mxu0 0
    %601 = vmatpush1.bf16.msra.mxu0 0
    %602 = vmatprep.subr.bf16.mxu0 0
    %603 = vmatpush1.bf16.msra.mxu0 0
    %604 = vmatprep.subr.bf16.mxu0 0
    %605 = vmatpush1.bf16.msra.mxu0 0
    %606 = vmatprep.subr.bf16.mxu0 0
    %607 = vmatpush1.bf16.msra.mxu0 0
    %608 = vmatprep.subr.bf16.mxu0 0
    %609 = vmatpush1.bf16.msra.mxu0 0
    %610 = vmatprep.subr.bf16.mxu0 0
    %611 = vmatpush1.bf16.msra.mxu0 0
    %612 = vmatprep.subr.bf16.mxu0 0
    %613 = vmatpush1.bf16.msra.mxu0 0
    %614 = vmatprep.subr.bf16.mxu0 0
    %615 = vmatpush1.bf16.msra.mxu0 0
    %616 = vmatprep.subr.bf16.mxu0 0
    %617 = vmatpush1.bf16.msra.mxu0 0
    %618 = vmatprep.mubr.bf16.mxu0 0
    %619 = vmatmul.mubr.bf16.gmra.mrb[0].mxu0 %v580
    %v620 = vpop.f32.mrb[0].mxu0
    %v621 = vadd.f32 0.0, %v620
    %v622 = vpop.f32.mrb[0].mxu0
    %v623 = vpop.f32.mrb[0].mxu0
    %v624 = vpop.f32.mrb[0].mxu0
    %625 = vdwg.mxu0
    %v627 = vsel %vm460, %v578, 0
    %v630 = vsel %vm582, %v459, 0
    %632 = vmatprep.subr.bf16.mxu0 0
    %633 = vmatpush1.bf16.msra.mxu0 %v630
    %634 = vmatprep.subr.bf16.mxu0 0
    %635 = vmatpush1.bf16.msra.mxu0 0
    %636 = vmatprep.subr.bf16.mxu0 0
    %637 = vmatpush1.bf16.msra.mxu0 0
    %638 = vmatprep.subr.bf16.mxu0 0
    %639 = vmatpush1.bf16.msra.mxu0 0
    %640 = vmatprep.subr.bf16.mxu0 0
    %641 = vmatpush1.bf16.msra.mxu0 0
    %642 = vmatprep.subr.bf16.mxu0 0
    %643 = vmatpush1.bf16.msra.mxu0 0
    %644 = vmatprep.subr.bf16.mxu0 0
    %645 = vmatpush1.bf16.msra.mxu0 0
    %646 = vmatprep.subr.bf16.mxu0 0
    %647 = vmatpush1.bf16.msra.mxu0 0
    %648 = vmatprep.subr.bf16.mxu0 0
    %649 = vmatpush1.bf16.msra.mxu0 0
    %650 = vmatprep.subr.bf16.mxu0 0
    %651 = vmatpush1.bf16.msra.mxu0 0
    %652 = vmatprep.subr.bf16.mxu0 0
    %653 = vmatpush1.bf16.msra.mxu0 0
    %654 = vmatprep.subr.bf16.mxu0 0
    %655 = vmatpush1.bf16.msra.mxu0 0
    %656 = vmatprep.subr.bf16.mxu0 0
    %657 = vmatpush1.bf16.msra.mxu0 0
    %658 = vmatprep.subr.bf16.mxu0 0
    %659 = vmatpush1.bf16.msra.mxu0 0
    %660 = vmatprep.subr.bf16.mxu0 0
    %661 = vmatpush1.bf16.msra.mxu0 0
    %662 = vmatprep.subr.bf16.mxu0 0
    %663 = vmatpush1.bf16.msra.mxu0 0
    %664 = vmatprep.mubr.bf16.mxu0 0
    %665 = vmatmul.mubr.bf16.gmra.mrb[0].mxu0 %v627
    %v666 = vpop.f32.mrb[0].mxu0
    %v667 = vadd.f32 0.0, %v666
    %v668 = vpop.f32.mrb[0].mxu0
    %v669 = vpop.f32.mrb[0].mxu0
    %v670 = vpop.f32.mrb[0].mxu0
    %671 = vdwg.mxu0
    %672 = vst.msk [vmem:[#allocation4] sm:$0xff] %vm460, %v621
    %673 = vst.msk [vmem:[#allocation4 + $0x8] sm:$0xff] %vm460, %v667
    %675 = vrot.lane.b32.xlu0 %v454, 120
    %v676 = vpop.permute.xlu0 %675
    %678 = vrot.lane.b32.xlu0 %v456, 120
    %v679 = vpop.permute.xlu0 %678
    %v681 = vsel %vm460, %v676, 0
    %v684 = vsel %vm460, %v679, 0
    %686 = vmatprep.subr.bf16.mxu0 0
    %687 = vmatpush1.bf16.xpose.msra.mxu0 %v684
    %688 = vmatprep.subr.bf16.mxu0 0
    %689 = vmatpush1.bf16.xpose.msra.mxu0 0
    %690 = vmatprep.subr.bf16.mxu0 0
    %691 = vmatpush1.bf16.xpose.msra.mxu0 0
    %692 = vmatprep.subr.bf16.mxu0 0
    %693 = vmatpush1.bf16.xpose.msra.mxu0 0
    %694 = vmatprep.subr.bf16.mxu0 0
    %695 = vmatpush1.bf16.xpose.msra.mxu0 0
    %696 = vmatprep.subr.bf16.mxu0 0
    %697 = vmatpush1.bf16.xpose.msra.mxu0 0
    %698 = vmatprep.subr.bf16.mxu0 0
    %699 = vmatpush1.bf16.xpose.msra.mxu0 0
    %700 = vmatprep.subr.bf16.mxu0 0
    %701 = vmatpush1.bf16.xpose.msra.mxu0 0
    %702 = vmatprep.subr.bf16.mxu0 0
    %703 = vmatpush1.bf16.xpose.msra.mxu0 0
    %704 = vmatprep.subr.bf16.mxu0 0
    %705 = vmatpush1.bf16.xpose.msra.mxu0 0
    %706 = vmatprep.subr.bf16.mxu0 0
    %707 = vmatpush1.bf16.xpose.msra.mxu0 0
    %708 = vmatprep.subr.bf16.mxu0 0
    %709 = vmatpush1.bf16.xpose.msra.mxu0 0
    %710 = vmatprep.subr.bf16.mxu0 0
    %711 = vmatpush1.bf16.xpose.msra.mxu0 0
    %712 = vmatprep.subr.bf16.mxu0 0
    %713 = vmatpush1.bf16.xpose.msra.mxu0 0
    %714 = vmatprep.subr.bf16.mxu0 0
    %715 = vmatpush1.bf16.xpose.msra.mxu0 0
    %716 = vmatprep.subr.bf16.mxu0 0
    %717 = vmatpush1.bf16.xpose.msra.mxu0 0
    %718 = vmatprep.mubr.bf16.mxu0 0
    %719 = vmatmul.mubr.bf16.gmra.mrb[0].mxu0 %v681
    %v720 = vpop.f32.mrb[0].mxu0
    %v721 = vadd.f32 0.0, %v720
    %v722 = vpop.f32.mrb[0].mxu0
    %v723 = vpop.f32.mrb[0].mxu0
    %v724 = vpop.f32.mrb[0].mxu0
    %725 = vdwg.mxu0
    %727 = vrot.lane.b32.xlu0 %v455, 120
    %v728 = vpop.permute.xlu0 %727
    %730 = vrot.lane.b32.xlu0 %v457, 120
    %v731 = vpop.permute.xlu0 %730
    %v733 = vsel %vm460, %v728, 0
    %v736 = vsel %vm460, %v731, 0
    %738 = vmatprep.subr.bf16.mxu0 0
    %739 = vmatpush1.bf16.xpose.msra.mxu0 %v736
    %740 = vmatprep.subr.bf16.mxu0 0
    %741 = vmatpush1.bf16.xpose.msra.mxu0 0
    %742 = vmatprep.subr.bf16.mxu0 0
    %743 = vmatpush1.bf16.xpose.msra.mxu0 0
    %744 = vmatprep.subr.bf16.mxu0 0
    %745 = vmatpush1.bf16.xpose.msra.mxu0 0
    %746 = vmatprep.subr.bf16.mxu0 0
    %747 = vmatpush1.bf16.xpose.msra.mxu0 0
    %748 = vmatprep.subr.bf16.mxu0 0
    %749 = vmatpush1.bf16.xpose.msra.mxu0 0
    %750 = vmatprep.subr.bf16.mxu0 0
    %751 = vmatpush1.bf16.xpose.msra.mxu0 0
    %752 = vmatprep.subr.bf16.mxu0 0
    %753 = vmatpush1.bf16.xpose.msra.mxu0 0
    %754 = vmatprep.subr.bf16.mxu0 0
    %755 = vmatpush1.bf16.xpose.msra.mxu0 0
    %756 = vmatprep.subr.bf16.mxu0 0
    %757 = vmatpush1.bf16.xpose.msra.mxu0 0
    %758 = vmatprep.subr.bf16.mxu0 0
    %759 = vmatpush1.bf16.xpose.msra.mxu0 0
    %760 = vmatprep.subr.bf16.mxu0 0
    %761 = vmatpush1.bf16.xpose.msra.mxu0 0
    %762 = vmatprep.subr.bf16.mxu0 0
    %763 = vmatpush1.bf16.xpose.msra.mxu0 0
    %764 = vmatprep.subr.bf16.mxu0 0
    %765 = vmatpush1.bf16.xpose.msra.mxu0 0
    %766 = vmatprep.subr.bf16.mxu0 0
    %767 = vmatpush1.bf16.xpose.msra.mxu0 0
    %768 = vmatprep.subr.bf16.mxu0 0
    %769 = vmatpush1.bf16.xpose.msra.mxu0 0
    %770 = vmatprep.mubr.bf16.mxu0 0
    %771 = vmatmul.mubr.bf16.gmra.mrb[0].mxu0 %v733
    %v772 = vpop.f32.mrb[0].mxu0
    %v773 = vadd.f32 0.0, %v772
    %v774 = vpop.f32.mrb[0].mxu0
    %v775 = vpop.f32.mrb[0].mxu0
    %v776 = vpop.f32.mrb[0].mxu0
    %777 = vdwg.mxu0
    %v778 = vsel %vm460, %v721, -inf
    %779 = vmax.xlane.f32.xlu0 %v778
    %v780 = vpop.xlane.xlu0 %779
    %v781 = vsel %vm460, %v773, -inf
    %782 = vmax.xlane.f32.xlu0 %v781
    %v783 = vpop.xlane.xlu0 %782
    %v784 = vsub.f32 %v721, %v780
    %v785 = vsub.f32 %v773, %v783
    %v786 = vmul.f32 %v784, 1.442695
    %v787 = vpow.pop %v786
    %v788 = vmul.f32 %v785, 1.442695
    %v789 = vpow.pop %v788
    %v790 = vsel %vm460, %v787, 0.0
    %791 = vadd.xlane.f32.xlu0 %v790
    %v792 = vpop.xlane.xlu0 %791
    %v793 = vsel %vm460, %v789, 0.0
    %794 = vadd.xlane.f32.xlu0 %v793
    %v795 = vpop.xlane.xlu0 %794
    %v796 = vrcp.pop %v792
    %v797 = vrcp.pop %v795
    %v798 = vmul.f32 %v787, %v796
    %v799 = vmul.f32 %v789, %v797
    %v800 = vadd.f32 %v575, %v798
    %v801 = vadd.f32 %v576, %v799
    %v802 = vpack.c.bf16 %v798, %v798
    %v803 = vpack.c.bf16 %v799, %v799
    %805 = vrot.lane.b32.xlu0 %v458, 120
    %v806 = vpop.permute.xlu0 %805
    %v808 = vsel %vm460, %v802, 0
    %v811 = vsel %vm582, %v806, 0
    %813 = vmatprep.subr.bf16.mxu0 0
    %814 = vmatpush1.bf16.msra.mxu0 %v811
    %815 = vmatprep.subr.bf16.mxu0 0
    %816 = vmatpush1.bf16.msra.mxu0 0
    %817 = vmatprep.subr.bf16.mxu0 0
    %818 = vmatpush1.bf16.msra.mxu0 0
    %819 = vmatprep.subr.bf16.mxu0 0
    %820 = vmatpush1.bf16.msra.mxu0 0
    %821 = vmatprep.subr.bf16.mxu0 0
    %822 = vmatpush1.bf16.msra.mxu0 0
    %823 = vmatprep.subr.bf16.mxu0 0
    %824 = vmatpush1.bf16.msra.mxu0 0
    %825 = vmatprep.subr.bf16.mxu0 0
    %826 = vmatpush1.bf16.msra.mxu0 0
    %827 = vmatprep.subr.bf16.mxu0 0
    %828 = vmatpush1.bf16.msra.mxu0 0
    %829 = vmatprep.subr.bf16.mxu0 0
    %830 = vmatpush1.bf16.msra.mxu0 0
    %831 = vmatprep.subr.bf16.mxu0 0
    %832 = vmatpush1.bf16.msra.mxu0 0
    %833 = vmatprep.subr.bf16.mxu0 0
    %834 = vmatpush1.bf16.msra.mxu0 0
    %835 = vmatprep.subr.bf16.mxu0 0
    %836 = vmatpush1.bf16.msra.mxu0 0
    %837 = vmatprep.subr.bf16.mxu0 0
    %838 = vmatpush1.bf16.msra.mxu0 0
    %839 = vmatprep.subr.bf16.mxu0 0
    %840 = vmatpush1.bf16.msra.mxu0 0
    %841 = vmatprep.subr.bf16.mxu0 0
    %842 = vmatpush1.bf16.msra.mxu0 0
    %843 = vmatprep.subr.bf16.mxu0 0
    %844 = vmatpush1.bf16.msra.mxu0 0
    %845 = vmatprep.mubr.bf16.mxu0 0
    %846 = vmatmul.mubr.bf16.gmra.mrb[0].mxu0 %v808
    %v847 = vpop.f32.mrb[0].mxu0
    %v848 = vadd.f32 0.0, %v847
    %v849 = vpop.f32.mrb[0].mxu0
    %v850 = vpop.f32.mrb[0].mxu0
    %v851 = vpop.f32.mrb[0].mxu0
    %852 = vdwg.mxu0
    %854 = vrot.lane.b32.xlu0 %v459, 120
    %v855 = vpop.permute.xlu0 %854
    %v857 = vsel %vm460, %v803, 0
    %v860 = vsel %vm582, %v855, 0
    %862 = vmatprep.subr.bf16.mxu0 0
    %863 = vmatpush1.bf16.msra.mxu0 %v860
    %864 = vmatprep.subr.bf16.mxu0 0
    %865 = vmatpush1.bf16.msra.mxu0 0
    %866 = vmatprep.subr.bf16.mxu0 0
    %867 = vmatpush1.bf16.msra.mxu0 0
    %868 = vmatprep.subr.bf16.mxu0 0
    %869 = vmatpush1.bf16.msra.mxu0 0
    %870 = vmatprep.subr.bf16.mxu0 0
    %871 = vmatpush1.bf16.msra.mxu0 0
    %872 = vmatprep.subr.bf16.mxu0 0
    %873 = vmatpush1.bf16.msra.mxu0 0
    %874 = vmatprep.subr.bf16.mxu0 0
    %875 = vmatpush1.bf16.msra.mxu0 0
    %876 = vmatprep.subr.bf16.mxu0 0
    %877 = vmatpush1.bf16.msra.mxu0 0
    %878 = vmatprep.subr.bf16.mxu0 0
    %879 = vmatpush1.bf16.msra.mxu0 0
    %880 = vmatprep.subr.bf16.mxu0 0
    %881 = vmatpush1.bf16.msra.mxu0 0
    %882 = vmatprep.subr.bf16.mxu0 0
    %883 = vmatpush1.bf16.msra.mxu0 0
    %884 = vmatprep.subr.bf16.mxu0 0
    %885 = vmatpush1.bf16.msra.mxu0 0
    %886 = vmatprep.subr.bf16.mxu0 0
    %887 = vmatpush1.bf16.msra.mxu0 0
    %888 = vmatprep.subr.bf16.mxu0 0
    %889 = vmatpush1.bf16.msra.mxu0 0
    %890 = vmatprep.subr.bf16.mxu0 0
    %891 = vmatpush1.bf16.msra.mxu0 0
    %892 = vmatprep.subr.bf16.mxu0 0
    %893 = vmatpush1.bf16.msra.mxu0 0
    %894 = vmatprep.mubr.bf16.mxu0 0
    %895 = vmatmul.mubr.bf16.gmra.mrb[0].mxu0 %v857
    %v896 = vpop.f32.mrb[0].mxu0
    %v897 = vadd.f32 0.0, %v896
    %v898 = vpop.f32.mrb[0].mxu0
    %v899 = vpop.f32.mrb[0].mxu0
    %v900 = vpop.f32.mrb[0].mxu0
    %901 = vdwg.mxu0
    %904 = vrot.lane.b32.xlu0 %v848, 8
    %v905 = vpop.permute.xlu0 %904
    %906 = vrot.lane.b32.xlu0 %v897, 8
    %v907 = vpop.permute.xlu0 %906
    %vm910 = vcmask 130112
    %911 = vst.msk [vmem:[#allocation4] sm:$0xff] %vm910, %v905
    %912 = vst.msk [vmem:[#allocation4 + $0x8] sm:$0xff] %vm910, %v907
    %913 = vrot.lane.b32.xlu0 %v454, 112
    %v914 = vpop.permute.xlu0 %913
    %915 = vrot.lane.b32.xlu0 %v456, 112
    %v916 = vpop.permute.xlu0 %915
    %v918 = vsel %vm460, %v914, 0
    %v921 = vsel %vm460, %v916, 0
    %923 = vmatprep.subr.bf16.mxu0 0
    %924 = vmatpush1.bf16.xpose.msra.mxu0 %v921
    %925 = vmatprep.subr.bf16.mxu0 0
    %926 = vmatpush1.bf16.xpose.msra.mxu0 0
    %927 = vmatprep.subr.bf16.mxu0 0
    %928 = vmatpush1.bf16.xpose.msra.mxu0 0
    %929 = vmatprep.subr.bf16.mxu0 0
    %930 = vmatpush1.bf16.xpose.msra.mxu0 0
    %931 = vmatprep.subr.bf16.mxu0 0
    %932 = vmatpush1.bf16.xpose.msra.mxu0 0
    %933 = vmatprep.subr.bf16.mxu0 0
    %934 = vmatpush1.bf16.xpose.msra.mxu0 0
    %935 = vmatprep.subr.bf16.mxu0 0
    %936 = vmatpush1.bf16.xpose.msra.mxu0 0
    %937 = vmatprep.subr.bf16.mxu0 0
    %938 = vmatpush1.bf16.xpose.msra.mxu0 0
    %939 = vmatprep.subr.bf16.mxu0 0
    %940 = vmatpush1.bf16.xpose.msra.mxu0 0
    %941 = vmatprep.subr.bf16.mxu0 0
    %942 = vmatpush1.bf16.xpose.msra.mxu0 0
    %943 = vmatprep.subr.bf16.mxu0 0
    %944 = vmatpush1.bf16.xpose.msra.mxu0 0
    %945 = vmatprep.subr.bf16.mxu0 0
    %946 = vmatpush1.bf16.xpose.msra.mxu0 0
    %947 = vmatprep.subr.bf16.mxu0 0
    %948 = vmatpush1.bf16.xpose.msra.mxu0 0
    %949 = vmatprep.subr.bf16.mxu0 0
    %950 = vmatpush1.bf16.xpose.msra.mxu0 0
    %951 = vmatprep.subr.bf16.mxu0 0
    %952 = vmatpush1.bf16.xpose.msra.mxu0 0
    %953 = vmatprep.subr.bf16.mxu0 0
    %954 = vmatpush1.bf16.xpose.msra.mxu0 0
    %955 = vmatprep.mubr.bf16.mxu0 0
    %956 = vmatmul.mubr.bf16.gmra.mrb[0].mxu0 %v918
    %v957 = vpop.f32.mrb[0].mxu0
    %v958 = vadd.f32 0.0, %v957
    %v959 = vpop.f32.mrb[0].mxu0
    %v960 = vpop.f32.mrb[0].mxu0
    %v961 = vpop.f32.mrb[0].mxu0
    %962 = vdwg.mxu0
    %963 = vrot.lane.b32.xlu0 %v455, 112
    %v964 = vpop.permute.xlu0 %963
    %965 = vrot.lane.b32.xlu0 %v457, 112
    %v966 = vpop.permute.xlu0 %965
    %v968 = vsel %vm460, %v964, 0
    %v971 = vsel %vm460, %v966, 0
    %973 = vmatprep.subr.bf16.mxu0 0
    %974 = vmatpush1.bf16.xpose.msra.mxu0 %v971
    %975 = vmatprep.subr.bf16.mxu0 0
    %976 = vmatpush1.bf16.xpose.msra.mxu0 0
    %977 = vmatprep.subr.bf16.mxu0 0
    %978 = vmatpush1.bf16.xpose.msra.mxu0 0
    %979 = vmatprep.subr.bf16.mxu0 0
    %980 = vmatpush1.bf16.xpose.msra.mxu0 0
    %981 = vmatprep.subr.bf16.mxu0 0
    %982 = vmatpush1.bf16.xpose.msra.mxu0 0
    %983 = vmatprep.subr.bf16.mxu0 0
    %984 = vmatpush1.bf16.xpose.msra.mxu0 0
    %985 = vmatprep.subr.bf16.mxu0 0
    %986 = vmatpush1.bf16.xpose.msra.mxu0 0
    %987 = vmatprep.subr.bf16.mxu0 0
    %988 = vmatpush1.bf16.xpose.msra.mxu0 0
    %989 = vmatprep.subr.bf16.mxu0 0
    %990 = vmatpush1.bf16.xpose.msra.mxu0 0
    %991 = vmatprep.subr.bf16.mxu0 0
    %992 = vmatpush1.bf16.xpose.msra.mxu0 0
    %993 = vmatprep.subr.bf16.mxu0 0
    %994 = vmatpush1.bf16.xpose.msra.mxu0 0
    %995 = vmatprep.subr.bf16.mxu0 0
    %996 = vmatpush1.bf16.xpose.msra.mxu0 0
    %997 = vmatprep.subr.bf16.mxu0 0
    %998 = vmatpush1.bf16.xpose.msra.mxu0 0
    %999 = vmatprep.subr.bf16.mxu0 0
    %1000 = vmatpush1.bf16.xpose.msra.mxu0 0
    %1001 = vmatprep.subr.bf16.mxu0 0
    %1002 = vmatpush1.bf16.xpose.msra.mxu0 0
    %1003 = vmatprep.subr.bf16.mxu0 0
    %1004 = vmatpush1.bf16.xpose.msra.mxu0 0
    %1005 = vmatprep.mubr.bf16.mxu0 0
    %1006 = vmatmul.mubr.bf16.gmra.mrb[0].mxu0 %v968
    %v1007 = vpop.f32.mrb[0].mxu0
    %v1008 = vadd.f32 0.0, %v1007
    %v1009 = vpop.f32.mrb[0].mxu0
    %v1010 = vpop.f32.mrb[0].mxu0
    %v1011 = vpop.f32.mrb[0].mxu0
    %1012 = vdwg.mxu0
    %v1013 = vsel %vm460, %v958, -inf
    %1014 = vmax.xlane.f32.xlu0 %v1013
    %v1015 = vpop.xlane.xlu0 %1014
    %v1016 = vsel %vm460, %v1008, -inf
    %1017 = vmax.xlane.f32.xlu0 %v1016
    %v1018 = vpop.xlane.xlu0 %1017
    %v1019 = vsub.f32 %v958, %v1015
    %v1020 = vsub.f32 %v1008, %v1018
    %v1021 = vmul.f32 %v1019, 1.442695
    %v1022 = vpow.pop %v1021
    %v1023 = vmul.f32 %v1020, 1.442695
    %v1024 = vpow.pop %v1023
    %v1025 = vsel %vm460, %v1022, 0.0
    %1026 = vadd.xlane.f32.xlu0 %v1025
    %v1027 = vpop.xlane.xlu0 %1026
    %v1028 = vsel %vm460, %v1024, 0.0
    %1029 = vadd.xlane.f32.xlu0 %v1028
    %v1030 = vpop.xlane.xlu0 %1029
    %v1031 = vrcp.pop %v1027
    %v1032 = vrcp.pop %v1030
    %v1033 = vmul.f32 %v1022, %v1031
    %v1034 = vmul.f32 %v1024, %v1032
    %v1035 = vadd.f32 %v800, %v1033
    %v1036 = vadd.f32 %v801, %v1034
    %v1037 = vpack.c.bf16 %v1033, %v1033
    %v1038 = vpack.c.bf16 %v1034, %v1034
    %1039 = vrot.lane.b32.xlu0 %v458, 112
    %v1040 = vpop.permute.xlu0 %1039
    %v1042 = vsel %vm460, %v1037, 0
    %v1045 = vsel %vm582, %v1040, 0
    %1047 = vmatprep.subr.bf16.mxu0 0
    %1048 = vmatpush1.bf16.msra.mxu0 %v1045
    %1049 = vmatprep.subr.bf16.mxu0 0
    %1050 = vmatpush1.bf16.msra.mxu0 0
    %1051 = vmatprep.subr.bf16.mxu0 0
    %1052 = vmatpush1.bf16.msra.mxu0 0
    %1053 = vmatprep.subr.bf16.mxu0 0
    %1054 = vmatpush1.bf16.msra.mxu0 0
    %1055 = vmatprep.subr.bf16.mxu0 0
    %1056 = vmatpush1.bf16.msra.mxu0 0
    %1057 = vmatprep.subr.bf16.mxu0 0
    %1058 = vmatpush1.bf16.msra.mxu0 0
    %1059 = vmatprep.subr.bf16.mxu0 0
    %1060 = vmatpush1.bf16.msra.mxu0 0
    %1061 = vmatprep.subr.bf16.mxu0 0
    %1062 = vmatpush1.bf16.msra.mxu0 0
    %1063 = vmatprep.subr.bf16.mxu0 0
    %1064 = vmatpush1.bf16.msra.mxu0 0
    %1065 = vmatprep.subr.bf16.mxu0 0
    %1066 = vmatpush1.bf16.msra.mxu0 0
    %1067 = vmatprep.subr.bf16.mxu0 0
    %1068 = vmatpush1.bf16.msra.mxu0 0
    %1069 = vmatprep.subr.bf16.mxu0 0
    %1070 = vmatpush1.bf16.msra.mxu0 0
    %1071 = vmatprep.subr.bf16.mxu0 0
    %1072 = vmatpush1.bf16.msra.mxu0 0
    %1073 = vmatprep.subr.bf16.mxu0 0
    %1074 = vmatpush1.bf16.msra.mxu0 0
    %1075 = vmatprep.subr.bf16.mxu0 0
    %1076 = vmatpush1.bf16.msra.mxu0 0
    %1077 = vmatprep.subr.bf16.mxu0 0
    %1078 = vmatpush1.bf16.msra.mxu0 0
    %1079 = vmatprep.mubr.bf16.mxu0 0
    %1080 = vmatmul.mubr.bf16.gmra.mrb[0].mxu0 %v1042
    %v1081 = vpop.f32.mrb[0].mxu0
    %v1082 = vadd.f32 0.0, %v1081
    %v1083 = vpop.f32.mrb[0].mxu0
    %v1084 = vpop.f32.mrb[0].mxu0
    %v1085 = vpop.f32.mrb[0].mxu0
    %1086 = vdwg.mxu0
    %1087 = vrot.lane.b32.xlu0 %v459, 112
    %v1088 = vpop.permute.xlu0 %1087
    %v1090 = vsel %vm460, %v1038, 0
    %v1093 = vsel %vm582, %v1088, 0
    %1095 = vmatprep.subr.bf16.mxu0 0
    %1096 = vmatpush1.bf16.msra.mxu0 %v1093
    %1097 = vmatprep.subr.bf16.mxu0 0
    %1098 = vmatpush1.bf16.msra.mxu0 0
    %1099 = vmatprep.subr.bf16.mxu0 0
    %1100 = vmatpush1.bf16.msra.mxu0 0
    %1101 = vmatprep.subr.bf16.mxu0 0
    %1102 = vmatpush1.bf16.msra.mxu0 0
    %1103 = vmatprep.subr.bf16.mxu0 0
    %1104 = vmatpush1.bf16.msra.mxu0 0
    %1105 = vmatprep.subr.bf16.mxu0 0
    %1106 = vmatpush1.bf16.msra.mxu0 0
    %1107 = vmatprep.subr.bf16.mxu0 0
    %1108 = vmatpush1.bf16.msra.mxu0 0
    %1109 = vmatprep.subr.bf16.mxu0 0
    %1110 = vmatpush1.bf16.msra.mxu0 0
    %1111 = vmatprep.subr.bf16.mxu0 0
    %1112 = vmatpush1.bf16.msra.mxu0 0
    %1113 = vmatprep.subr.bf16.mxu0 0
    %1114 = vmatpush1.bf16.msra.mxu0 0
    %1115 = vmatprep.subr.bf16.mxu0 0
    %1116 = vmatpush1.bf16.msra.mxu0 0
    %1117 = vmatprep.subr.bf16.mxu0 0
    %1118 = vmatpush1.bf16.msra.mxu0 0
    %1119 = vmatprep.subr.bf16.mxu0 0
    %1120 = vmatpush1.bf16.msra.mxu0 0
    %1121 = vmatprep.subr.bf16.mxu0 0
    %1122 = vmatpush1.bf16.msra.mxu0 0
    %1123 = vmatprep.subr.bf16.mxu0 0
    %1124 = vmatpush1.bf16.msra.mxu0 0
    %1125 = vmatprep.subr.bf16.mxu0 0
    %1126 = vmatpush1.bf16.msra.mxu0 0
    %1127 = vmatprep.mubr.bf16.mxu0 0
    %1128 = vmatmul.mubr.bf16.gmra.mrb[0].mxu0 %v1090
    %v1129 = vpop.f32.mrb[0].mxu0
    %v1130 = vadd.f32 0.0, %v1129
    %v1131 = vpop.f32.mrb[0].mxu0
    %v1132 = vpop.f32.mrb[0].mxu0
    %v1133 = vpop.f32.mrb[0].mxu0
    %1134 = vdwg.mxu0
    %1137 = vrot.lane.b32.xlu0 %v1082, 16
    %v1138 = vpop.permute.xlu0 %1137
    %1139 = vrot.lane.b32.xlu0 %v1130, 16
    %v1140 = vpop.permute.xlu0 %1139
    %vm1143 = vcmask 195712
    %1144 = vst.msk [vmem:[#allocation4] sm:$0xff] %vm1143, %v1138
    %1145 = vst.msk [vmem:[#allocation4 + $0x8] sm:$0xff] %vm1143, %v1140
    %1146 = vrot.lane.b32.xlu0 %v454, 104
    %v1147 = vpop.permute.xlu0 %1146
    %1148 = vrot.lane.b32.xlu0 %v456, 104
    %v1149 = vpop.permute.xlu0 %1148
    %v1151 = vsel %vm460, %v1147, 0
    %v1154 = vsel %vm460, %v1149, 0
    %1156 = vmatprep.subr.bf16.mxu0 0
    %1157 = vmatpush1.bf16.xpose.msra.mxu0 %v1154
    %1158 = vmatprep.subr.bf16.mxu0 0
    %1159 = vmatpush1.bf16.xpose.msra.mxu0 0
    %1160 = vmatprep.subr.bf16.mxu0 0
    %1161 = vmatpush1.bf16.xpose.msra.mxu0 0
    %1162 = vmatprep.subr.bf16.mxu0 0
    %1163 = vmatpush1.bf16.xpose.msra.mxu0 0
    %1164 = vmatprep.subr.bf16.mxu0 0
    %1165 = vmatpush1.bf16.xpose.msra.mxu0 0
    %1166 = vmatprep.subr.bf16.mxu0 0
    %1167 = vmatpush1.bf16.xpose.msra.mxu0 0
    %1168 = vmatprep.subr.bf16.mxu0 0
    %1169 = vmatpush1.bf16.xpose.msra.mxu0 0
    %1170 = vmatprep.subr.bf16.mxu0 0
    %1171 = vmatpush1.bf16.xpose.msra.mxu0 0
    %1172 = vmatprep.subr.bf16.mxu0 0
    %1173 = vmatpush1.bf16.xpose.msra.mxu0 0
    %1174 = vmatprep.subr.bf16.mxu0 0
    %1175 = vmatpush1.bf16.xpose.msra.mxu0 0
    %1176 = vmatprep.subr.bf16.mxu0 0
    %1177 = vmatpush1.bf16.xpose.msra.mxu0 0
    %1178 = vmatprep.subr.bf16.mxu0 0
    %1179 = vmatpush1.bf16.xpose.msra.mxu0 0
    %1180 = vmatprep.subr.bf16.mxu0 0
    %1181 = vmatpush1.bf16.xpose.msra.mxu0 0
    %1182 = vmatprep.subr.bf16.mxu0 0
    %1183 = vmatpush1.bf16.xpose.msra.mxu0 0
    %1184 = vmatprep.subr.bf16.mxu0 0
    %1185 = vmatpush1.bf16.xpose.msra.mxu0 0
    %1186 = vmatprep.subr.bf16.mxu0 0
    %1187 = vmatpush1.bf16.xpose.msra.mxu0 0
    %1188 = vmatprep.mubr.bf16.mxu0 0
    %1189 = vmatmul.mubr.bf16.gmra.mrb[0].mxu0 %v1151
    %v1190 = vpop.f32.mrb[0].mxu0
    %v1191 = vadd.f32 0.0, %v1190
    %v1192 = vpop.f32.mrb[0].mxu0
    %v1193 = vpop.f32.mrb[0].mxu0
    %v1194 = vpop.f32.mrb[0].mxu0
    %1195 = vdwg.mxu0
    %1196 = vrot.lane.b32.xlu0 %v455, 104
    %v1197 = vpop.permute.xlu0 %1196
    %1198 = vrot.lane.b32.xlu0 %v457, 104
    %v1199 = vpop.permute.xlu0 %1198
    %v1201 = vsel %vm460, %v1197, 0
    %v1204 = vsel %vm460, %v1199, 0
    %1206 = vmatprep.subr.bf16.mxu0 0
    %1207 = vmatpush1.bf16.xpose.msra.mxu0 %v1204
    %1208 = vmatprep.subr.bf16.mxu0 0
    %1209 = vmatpush1.bf16.xpose.msra.mxu0 0
    %1210 = vmatprep.subr.bf16.mxu0 0
    %1211 = vmatpush1.bf16.xpose.msra.mxu0 0
    %1212 = vmatprep.subr.bf16.mxu0 0
    %1213 = vmatpush1.bf16.xpose.msra.mxu0 0
    %1214 = vmatprep.subr.bf16.mxu0 0
    %1215 = vmatpush1.bf16.xpose.msra.mxu0 0
    %1216 = vmatprep.subr.bf16.mxu0 0
    %1217 = vmatpush1.bf16.xpose.msra.mxu0 0
    %1218 = vmatprep.subr.bf16.mxu0 0
    %1219 = vmatpush1.bf16.xpose.msra.mxu0 0
    %1220 = vmatprep.subr.bf16.mxu0 0
    %1221 = vmatpush1.bf16.xpose.msra.mxu0 0
    %1222 = vmatprep.subr.bf16.mxu0 0
    %1223 = vmatpush1.bf16.xpose.msra.mxu0 0
    %1224 = vmatprep.subr.bf16.mxu0 0
    %1225 = vmatpush1.bf16.xpose.msra.mxu0 0
    %1226 = vmatprep.subr.bf16.mxu0 0
    %1227 = vmatpush1.bf16.xpose.msra.mxu0 0
    %1228 = vmatprep.subr.bf16.mxu0 0
    %1229 = vmatpush1.bf16.xpose.msra.mxu0 0
    %1230 = vmatprep.subr.bf16.mxu0 0
    %1231 = vmatpush1.bf16.xpose.msra.mxu0 0
    %1232 = vmatprep.subr.bf16.mxu0 0
    %1233 = vmatpush1.bf16.xpose.msra.mxu0 0
    %1234 = vmatprep.subr.bf16.mxu0 0
    %1235 = vmatpush1.bf16.xpose.msra.mxu0 0
    %1236 = vmatprep.subr.bf16.mxu0 0
    %1237 = vmatpush1.bf16.xpose.msra.mxu0 0
    %1238 = vmatprep.mubr.bf16.mxu0 0
    %1239 = vmatmul.mubr.bf16.gmra.mrb[0].mxu0 %v1201
    %v1240 = vpop.f32.mrb[0].mxu0
    %v1241 = vadd.f32 0.0, %v1240
    %v1242 = vpop.f32.mrb[0].mxu0
    %v1243 = vpop.f32.mrb[0].mxu0
    %v1244 = vpop.f32.mrb[0].mxu0
    %1245 = vdwg.mxu0
    %v1246 = vsel %vm460, %v1191, -inf
    %1247 = vmax.xlane.f32.xlu0 %v1246
    %v1248 = vpop.xlane.xlu0 %1247
    %v1249 = vsel %vm460, %v1241, -inf
    %1250 = vmax.xlane.f32.xlu0 %v1249
    %v1251 = vpop.xlane.xlu0 %1250
    %v1252 = vsub.f32 %v1191, %v1248
    %v1253 = vsub.f32 %v1241, %v1251
    %v1254 = vmul.f32 %v1252, 1.442695
    %v1255 = vpow.pop %v1254
    %v1256 = vmul.f32 %v1253, 1.442695
    %v1257 = vpow.pop %v1256
    %v1258 = vsel %vm460, %v1255, 0.0
    %1259 = vadd.xlane.f32.xlu0 %v1258
    %v1260 = vpop.xlane.xlu0 %1259
    %v1261 = vsel %vm460, %v1257, 0.0
    %1262 = vadd.xlane.f32.xlu0 %v1261
    %v1263 = vpop.xlane.xlu0 %1262
    %v1264 = vrcp.pop %v1260
    %v1265 = vrcp.pop %v1263
    %v1266 = vmul.f32 %v1255, %v1264
    %v1267 = vmul.f32 %v1257, %v1265
    %v1268 = vadd.f32 %v1035, %v1266
    %v1269 = vadd.f32 %v1036, %v1267
    %v1270 = vpack.c.bf16 %v1266, %v1266
    %v1271 = vpack.c.bf16 %v1267, %v1267
    %1272 = vrot.lane.b32.xlu0 %v458, 104
    %v1273 = vpop.permute.xlu0 %1272
    %v1275 = vsel %vm460, %v1270, 0
    %v1278 = vsel %vm582, %v1273, 0
    %1280 = vmatprep.subr.bf16.mxu0 0
    %1281 = vmatpush1.bf16.msra.mxu0 %v1278
    %1282 = vmatprep.subr.bf16.mxu0 0
    %1283 = vmatpush1.bf16.msra.mxu0 0
    %1284 = vmatprep.subr.bf16.mxu0 0
    %1285 = vmatpush1.bf16.msra.mxu0 0
    %1286 = vmatprep.subr.bf16.mxu0 0
    %1287 = vmatpush1.bf16.msra.mxu0 0
    %1288 = vmatprep.subr.bf16.mxu0 0
    %1289 = vmatpush1.bf16.msra.mxu0 0
    %1290 = vmatprep.subr.bf16.mxu0 0
    %1291 = vmatpush1.bf16.msra.mxu0 0
    %1292 = vmatprep.subr.bf16.mxu0 0
    %1293 = vmatpush1.bf16.msra.mxu0 0
    %1294 = vmatprep.subr.bf16.mxu0 0
    %1295 = vmatpush1.bf16.msra.mxu0 0
    %1296 = vmatprep.subr.bf16.mxu0 0
    %1297 = vmatpush1.bf16.msra.mxu0 0
    %1298 = vmatprep.subr.bf16.mxu0 0
    %1299 = vmatpush1.bf16.msra.mxu0 0
    %1300 = vmatprep.subr.bf16.mxu0 0
    %1301 = vmatpush1.bf16.msra.mxu0 0
    %1302 = vmatprep.subr.bf16.mxu0 0
    %1303 = vmatpush1.bf16.msra.mxu0 0
    %1304 = vmatprep.subr.bf16.mxu0 0
    %1305 = vmatpush1.bf16.msra.mxu0 0
    %1306 = vmatprep.subr.bf16.mxu0 0
    %1307 = vmatpush1.bf16.msra.mxu0 0
    %1308 = vmatprep.subr.bf16.mxu0 0
    %1309 = vmatpush1.bf16.msra.mxu0 0
    %1310 = vmatprep.subr.bf16.mxu0 0
    %1311 = vmatpush1.bf16.msra.mxu0 0
    %1312 = vmatprep.mubr.bf16.mxu0 0
    %1313 = vmatmul.mubr.bf16.gmra.mrb[0].mxu0 %v1275
    %v1314 = vpop.f32.mrb[0].mxu0
    %v1315 = vadd.f32 0.0, %v1314
    %v1316 = vpop.f32.mrb[0].mxu0
    %v1317 = vpop.f32.mrb[0].mxu0
    %v1318 = vpop.f32.mrb[0].mxu0
    %1319 = vdwg.mxu0
    %1320 = vrot.lane.b32.xlu0 %v459, 104
    %v1321 = vpop.permute.xlu0 %1320
    %v1323 = vsel %vm460, %v1271, 0
    %v1326 = vsel %vm582, %v1321, 0
    %1328 = vmatprep.subr.bf16.mxu0 0
    %1329 = vmatpush1.bf16.msra.mxu0 %v1326
    %1330 = vmatprep.subr.bf16.mxu0 0
    %1331 = vmatpush1.bf16.msra.mxu0 0
    %1332 = vmatprep.subr.bf16.mxu0 0
    %1333 = vmatpush1.bf16.msra.mxu0 0
    %1334 = vmatprep.subr.bf16.mxu0 0
    %1335 = vmatpush1.bf16.msra.mxu0 0
    %1336 = vmatprep.subr.bf16.mxu0 0
    %1337 = vmatpush1.bf16.msra.mxu0 0
    %1338 = vmatprep.subr.bf16.mxu0 0
    %1339 = vmatpush1.bf16.msra.mxu0 0
    %1340 = vmatprep.subr.bf16.mxu0 0
    %1341 = vmatpush1.bf16.msra.mxu0 0
    %1342 = vmatprep.subr.bf16.mxu0 0
    %1343 = vmatpush1.bf16.msra.mxu0 0
    %1344 = vmatprep.subr.bf16.mxu0 0
    %1345 = vmatpush1.bf16.msra.mxu0 0
    %1346 = vmatprep.subr.bf16.mxu0 0
    %1347 = vmatpush1.bf16.msra.mxu0 0
    %1348 = vmatprep.subr.bf16.mxu0 0
    %1349 = vmatpush1.bf16.msra.mxu0 0
    %1350 = vmatprep.subr.bf16.mxu0 0
    %1351 = vmatpush1.bf16.msra.mxu0 0
    %1352 = vmatprep.subr.bf16.mxu0 0
    %1353 = vmatpush1.bf16.msra.mxu0 0
    %1354 = vmatprep.subr.bf16.mxu0 0
    %1355 = vmatpush1.bf16.msra.mxu0 0
    %1356 = vmatprep.subr.bf16.mxu0 0
    %1357 = vmatpush1.bf16.msra.mxu0 0
    %1358 = vmatprep.subr.bf16.mxu0 0
    %1359 = vmatpush1.bf16.msra.mxu0 0
    %1360 = vmatprep.mubr.bf16.mxu0 0
    %1361 = vmatmul.mubr.bf16.gmra.mrb[0].mxu0 %v1323
    %v1362 = vpop.f32.mrb[0].mxu0
    %v1363 = vadd.f32 0.0, %v1362
    %v1364 = vpop.f32.mrb[0].mxu0
    %v1365 = vpop.f32.mrb[0].mxu0
    %v1366 = vpop.f32.mrb[0].mxu0
    %1367 = vdwg.mxu0
    %1370 = vrot.lane.b32.xlu0 %v1315, 24
    %v1371 = vpop.permute.xlu0 %1370
    %1372 = vrot.lane.b32.xlu0 %v1363, 24
    %v1373 = vpop.permute.xlu0 %1372
    %vm1376 = vcmask 261312
    %1377 = vst.msk [vmem:[#allocation4] sm:$0xff] %vm1376, %v1371
    %1378 = vst.msk [vmem:[#allocation4 + $0x8] sm:$0xff] %vm1376, %v1373
    %v1379 = vld [vmem:[#allocation4] sm:$0xff]
    %v1380 = vld [vmem:[#allocation4 + $0x8] sm:$0xff]
    %v1381 = vpack.c.bf16 %v1380, %v1379
    %v1382 = vld [vmem:[#allocation19] sm:$0xf]
    %v1383 = vld [vmem:[#allocation19 + $0x4] sm:$0xf]
    %v1384 = vld [vmem:[#allocation19 + $0x8] sm:$0xf]
    %v1385 = vld [vmem:[#allocation19 + $0xc] sm:$0xf]
    %v1386 = vld [vmem:[%s14] sm:$0x1]
    %v1388 = vlaneseq
    %v1389 = vshrl.u32 %v1388, 7
    %v1390 = vsub.s32 0, %v1389
    %v1391 = vrot.slane %v1386, %v1390
    %v1397 = vunpack.c.l.b16 %v1382
    %v1398 = vunpack.c.l.b16 %v1383
    %v1399 = vunpack.c.l.b16 %v1384
    %v1400 = vunpack.c.l.b16 %v1385
    %v1401 = vpack.c.b16 %v1398, %v1397
    %v1402 = vpack.c.b16 %v1400, %v1399
    %v1406 = vsel %vm267, %v1381, 0
    %1408 = vmatprep.subr.bf16.mxu0 0
    %1409 = vmatpush1.bf16.msra.mxu0 %v1401
    %1410 = vmatprep.subr.bf16.mxu0 0
    %1411 = vmatpush1.bf16.msra.mxu0 %v1402
    %1412 = vmatprep.subr.bf16.mxu0 0
    %1413 = vmatpush1.bf16.msra.mxu0 0
    %1414 = vmatprep.subr.bf16.mxu0 0
    %1415 = vmatpush1.bf16.msra.mxu0 0
    %1416 = vmatprep.subr.bf16.mxu0 0
    %1417 = vmatpush1.bf16.msra.mxu0 0
    %1418 = vmatprep.subr.bf16.mxu0 0
    %1419 = vmatpush1.bf16.msra.mxu0 0
    %1420 = vmatprep.subr.bf16.mxu0 0
    %1421 = vmatpush1.bf16.msra.mxu0 0
    %1422 = vmatprep.subr.bf16.mxu0 0
    %1423 = vmatpush1.bf16.msra.mxu0 0
    %1424 = vmatprep.subr.bf16.mxu0 0
    %1425 = vmatpush1.bf16.msra.mxu0 0
    %1426 = vmatprep.subr.bf16.mxu0 0
    %1427 = vmatpush1.bf16.msra.mxu0 0
    %1428 = vmatprep.subr.bf16.mxu0 0
    %1429 = vmatpush1.bf16.msra.mxu0 0
    %1430 = vmatprep.subr.bf16.mxu0 0
    %1431 = vmatpush1.bf16.msra.mxu0 0
    %1432 = vmatprep.subr.bf16.mxu0 0
    %1433 = vmatpush1.bf16.msra.mxu0 0
    %1434 = vmatprep.subr.bf16.mxu0 0
    %1435 = vmatpush1.bf16.msra.mxu0 0
    %1436 = vmatprep.subr.bf16.mxu0 0
    %1437 = vmatpush1.bf16.msra.mxu0 0
    %1438 = vmatprep.subr.bf16.mxu0 0
    %1439 = vmatpush1.bf16.msra.mxu0 0
    %1440 = vmatprep.mubr.bf16.mxu0 0
    %1441 = vmatmul.mubr.bf16.gmra.mrb[0].mxu0 %v1406
    %v1442 = vpop.f32.mrb[0].mxu0
    %v1443 = vadd.f32 %v1391, %v1442
    %v1444 = vpop.f32.mrb[0].mxu0
    %v1445 = vpop.f32.mrb[0].mxu0
    %v1446 = vadd.f32 %v1391, %v1445
    %v1447 = vpop.f32.mrb[0].mxu0
    %1448 = vdwg.mxu0
    %1449 = vst.msk [vmem:[#allocation20] sm:$0xff] %vm267, %v1443
    %1450 = vst.msk [vmem:[#allocation20 + $0x8] sm:$0xff] %vm267, %v1446
    %vm1451 = vcmask 1047808
    %1452 = vst.msk [vmem:[#allocation20] sm:$0xff] %vm1451, 0.0
    %1453 = vst.msk [vmem:[#allocation20 + $0x8] sm:$0xff] %vm1451, 0.0
    %v1454 = vmul.f32 %v1268, 0.25
    %v1455 = vmul.f32 %v1269, 0.25
    %1456 = vst.msk [vmem:[#allocation21] sm:$0xff] %vm460, %v1454
    %1457 = vst.msk [vmem:[#allocation21 + $0x8] sm:$0xff] %vm460, %v1455
    %vm1458 = vcmask 1047616
    %1459 = vst.msk [vmem:[#allocation21] sm:$0xff] %vm1458, 0.0
    %1460 = vst.msk [vmem:[#allocation21 + $0x8] sm:$0xff] %vm1458, 0.0
    // Predicated region
    $region98: #{tpu_custom_call.1} parent=1 // pred_check
      _
    $region99: #{tpu_custom_call.1} parent=1 // pred_check_branch
      %1462 = sbr.rel (0) target = $region101
    $region100: #{tpu_custom_call.1} parent=1 // pred_region
      %s1464 = ssub.s32 256, 256
      %1465 = vsyncadd [#allocation7], %s1464
      %s1466 = sshll.u32 [#allocation20], 4
      %s1467 = int_to_ptr.vmem [resolvable:$true] %s1466
      %1472 = dma.vmem_to_hbm [thread:$0]  %s1467, 256, %s15, [#allocation7], 128, 128, 8
    $region101: #{tpu_custom_call.1} parent=1 // pred_fallthru
      _
    // Predicated region
    $region102: #{tpu_custom_call.1} parent=1 // pred_check
      _
    $region103: #{tpu_custom_call.1} parent=1 // pred_check_branch
      %1474 = sbr.rel (0) target = $region105
    $region104: #{tpu_custom_call.1} parent=1 // pred_region
      %s1476 = ssub.s32 256, 256
      %1477 = vsyncadd [#allocation22], %s1476
      %s1478 = sshll.u32 [#allocation21], 4
      %s1479 = int_to_ptr.vmem [resolvable:$true] %s1478
      %1484 = dma.vmem_to_hbm [thread:$0]  %s1479, 256, %s16, [#allocation22], 128, 128, 8
    $region105: #{tpu_custom_call.1} parent=1 // pred_fallthru
      _
    // Predicated region
    $region106: #{tpu_custom_call.1} parent=1 // pred_check
      _
    $region107: #{tpu_custom_call.1} parent=1 // pred_check_branch
      %1486 = sbr.rel (0) target = $region109
    $region108: #{tpu_custom_call.1} parent=1 // pred_region
      %1487 = dma.done [#allocation7], 256
    $region109: #{tpu_custom_call.1} parent=1 // pred_fallthru
      _
    // Predicated region
    $region110: #{tpu_custom_call.1} parent=1 // pred_check
      _
    $region111: #{tpu_custom_call.1} parent=1 // pred_check_branch
      %1489 = sbr.rel (0) target = $region113
    $region112: #{tpu_custom_call.1} parent=1 // pred_region
      %1490 = dma.done [#allocation22], 256
    $region113: #{tpu_custom_call.1} parent=1 // pred_fallthru
      _
    %1491 = vsyncpa [#allocation6], 1
    %1492 = vsyncpa [#allocation9], 1
    %1493 = vsyncpa [#allocation12], 1
    %1494 = vsyncpa [#allocation15], 1
    %1495 = vsyncpa [#allocation18], 1
    %1496 = vsyncpa [#allocation7], 1
    %1497 = vsyncpa [#allocation22], 1

</llo_original>
